<compile_context>
chip_gen: v5e
topology: v5e:2x2
jax: 0.10.0
libtpu: 0.0.40
codegen_flags: <defaults>
</compile_context>

<pallas_src>
import functools

import jax
import jax.numpy as jnp
from jax.experimental import pallas as pl
from jax.experimental.pallas import tpu as pltpu

_VMEM_LIMIT = 32 * 1024 * 1024   # explicit scoped-VMEM limit: > v5e 16MiB default, <= v7x physical
_BN_EPS = 1e-5


def _round_up(x, m):
    return (x + m - 1) // m * m


def _cdiv(a, b):
    return -(-a // b)


def _pick_row_tile(rows, target):
    """Row tile: multiple of 16, <= target, and (when possible) >=2 blocks for the 2 TCs."""
    t = min(target, _round_up(rows, 16))
    if rows >= 32 and _round_up(rows, t) // t < 2:
        t = _round_up(_cdiv(rows, 2), 16)
    return t


def _pick_k_tile(K):
    """Full-K when small (<=1024), otherwise ~512-wide K tiles (multiple of 128)."""
    kp = _round_up(K, 128)
    if kp <= 1024:
        return kp
    nk = _cdiv(kp, 512)
    return _round_up(_cdiv(kp, nk), 128)


# ------------------------------------------------------------------------------------------
# Fused matmul + BatchNorm-statistics kernel (one per convolution)
# ------------------------------------------------------------------------------------------
def _matmul_stats_kernel(a_ref, b_ref, o_ref, st_ref, acc_ref):
    k = pl.program_id(1)

    @pl.when(k == 0)
    def _():
        acc_ref[...] = jnp.zeros_like(acc_ref)

    acc_ref[...] += jnp.dot(a_ref[...], b_ref[...], preferred_element_type=jnp.float32)

    @pl.when(k == pl.num_programs(1) - 1)          # store only on the last k step
    def _():
        acc = acc_ref[...]
        o_ref[...] = acc.astype(o_ref.dtype)
        n = acc.shape[1]
        s = jnp.sum(acc, axis=0, keepdims=True)            # (1, N) column sum
        q = jnp.sum(acc * acc, axis=0, keepdims=True)      # (1, N) column sum of squares
        rows8 = jax.lax.broadcasted_iota(jnp.int32, (8, n), 0)
        st = jnp.where(rows8 == 0, s, 0.0) + jnp.where(rows8 == 1, q, 0.0)
        st_ref[...] = st[None]                              # (1, 8, N): row0=sum, row1=sumsq


def matmul_stats_pallas(a, b, out_dtype=jnp.bfloat16):
    """C = A @ B with bf16 MXU inputs / f32 accumulation; also returns per-column sum and
    sum-of-squares of C (from the f32 accumulator) for the following BatchNorm.
    Returns (C padded to Mp rows, col_sum[N], col_sqsum[N])."""
    M, K = a.shape
    K2, N = b.shape
    assert K == K2
    tm = _pick_row_tile(M, 512)
    tk = _pick_k_tile(K)
    Mp = _round_up(M, tm)
    Kp = _round_up(K, tk)
    nim, nkm = Mp // tm, Kp // tk
    a = jnp.pad(a.astype(jnp.bfloat16), ((0, Mp - M), (0, Kp - K)))
    b = jnp.pad(b.astype(jnp.bfloat16), ((0, Kp - K), (0, 0)))        # full-N (no Cout padding)
    out, st = pl.pallas_call(
        _matmul_stats_kernel,
        out_shape=(jax.ShapeDtypeStruct((Mp, N), out_dtype),
                   jax.ShapeDtypeStruct((nim, 8, N), jnp.float32)),
        grid_spec=pltpu.PrefetchScalarGridSpec(
            num_scalar_prefetch=0,
            grid=(nim, nkm),
            in_specs=[pl.BlockSpec((tm, tk), lambda i, k: (i, k)),
                      pl.BlockSpec((tk, N), lambda i, k: (k, 0))],
            out_specs=(pl.BlockSpec((tm, N), lambda i, k: (i, 0)),
                       pl.BlockSpec((1, 8, N), lambda i, k: (i, 0, 0))),
            scratch_shapes=[pltpu.VMEM((tm, N), jnp.float32)]),
        compiler_params=pltpu.CompilerParams(
            dimension_semantics=("parallel", "arbitrary"),
            vmem_limit_bytes=_VMEM_LIMIT),
    )(a, b)
    col_sum = jnp.sum(st[:, 0, :], axis=0)
    col_sq = jnp.sum(st[:, 1, :], axis=0)
    return out, col_sum, col_sq


# ------------------------------------------------------------------------------------------
# Convolution = im2col (bf16 glue) + fused Pallas matmul/stats
# ------------------------------------------------------------------------------------------
def _im2col(x, KH, KW, stride, pad):
    Nb, H, W, Cin = x.shape
    OH = (H + 2 * pad - KH) // stride + 1
    OW = (W + 2 * pad - KW) // stride + 1
    xp = jnp.pad(x, ((0, 0), (pad, pad), (pad, pad), (0, 0))) if pad else x
    cols = [xp[:, i:i + stride * (OH - 1) + 1:stride,
               j:j + stride * (OW - 1) + 1:stride, :]
            for i in range(KH) for j in range(KW)]
    patches = jnp.concatenate(cols, axis=-1).reshape(Nb * OH * OW, KH * KW * Cin)
    return patches, OH, OW


def conv2d_bn_stats(x, w, stride, pad, out_dtype=jnp.bfloat16):
    """NHWC conv (weights HWIO, bias-free) + per-channel batch stats of its own output."""
    KH, KW, Cin, Cout = w.shape
    patches, OH, OW = _im2col(x.astype(jnp.bfloat16), KH, KW, stride, pad)
    out, col_sum, col_sq = matmul_stats_pallas(
        patches, w.reshape(KH * KW * Cin, Cout).astype(jnp.bfloat16), out_dtype=out_dtype)
    return out, OH, OW, col_sum, col_sq


# ------------------------------------------------------------------------------------------
# Fused BatchNorm-affine (+ residual-affine) (+ ReLU) elementwise kernel, lane-dense
# ------------------------------------------------------------------------------------------
def _affine_kernel(x_ref, s_ref, b_ref, o_ref, *, relu):
    y = x_ref[...].astype(jnp.float32) * s_ref[...] + b_ref[...]
    if relu:
        y = jnp.maximum(y, 0.0)
    o_ref[...] = y.astype(o_ref.dtype)


def _affine_res_kernel(x_ref, s_ref, b_ref, r_ref, rs_ref, rb_ref, o_ref, *, relu):
    y = (x_ref[...].astype(jnp.float32) * s_ref[...] + b_ref[...]
         + r_ref[...].astype(jnp.float32) * rs_ref[...] + rb_ref[...])
    if relu:
        y = jnp.maximum(y, 0.0)
    o_ref[...] = y.astype(o_ref.dtype)


def _fit_rows(a, rows):
    m = a.shape[0]
    if m == rows:
        return a
    if m > rows:
        return a[:rows]
    return jnp.pad(a, ((0, rows - m), (0, 0)))


def _fold_vec(v, fold, L):
    return jnp.tile(v.astype(jnp.float32), fold).reshape(1, L)


def affine_pallas(x2d, scale, shift, *, residual=None, res_scale=None, res_shift=None,
                  relu=True, rows=None, out_dtype=jnp.float32, row_tile=1024):
    """y = x*scale + shift (+ residual*res_scale + res_shift) (+ ReLU).
    Channels < 128 are folded into the 128-lane axis so stores are lane-dense."""
    C = x2d.shape[1]
    if rows is None:
        rows = x2d.shape[0]
    fold = 128 // C if (C < 128 and 128 % C == 0) else 1
    L = fold * C
    mf = _cdiv(rows, fold)
    tma = _pick_row_tile(mf, row_tile)
    mfp = _round_up(mf, tma)
    rows_p = mfp * fold

    xf = _fit_rows(x2d, rows_p).reshape(mfp, L)
    s = _fold_vec(scale, fold, L)
    b = _fold_vec(shift, fold, L)

    vec = pl.BlockSpec((tma, L), lambda i: (i, 0))
    row = pl.BlockSpec((1, L), lambda i: (0, 0))
    cp = pltpu.CompilerParams(dimension_semantics=("parallel",),
                              vmem_limit_bytes=_VMEM_LIMIT)

    if residual is None:
        out = pl.pallas_call(
            functools.partial(_affine_kernel, relu=relu),
            out_shape=jax.ShapeDtypeStruct((mfp, L), out_dtype),
            grid=(mfp // tma,),
            in_specs=[vec, row, row],
            out_specs=vec,
            compiler_params=cp,
        )(xf, s, b)
    else:
        rf = _fit_rows(residual, rows_p).reshape(mfp, L)
        rs = _fold_vec(res_scale, fold, L)
        rb = _fold_vec(res_shift, fold, L)
        out = pl.pallas_call(
            functools.partial(_affine_res_kernel, relu=relu),
            out_shape=jax.ShapeDtypeStruct((mfp, L), out_dtype),
            grid=(mfp // tma,),
            in_specs=[vec, row, row, vec, row, row],
            out_specs=vec,
            compiler_params=cp,
        )(xf, s, b, rf, rs, rb)
    return out.reshape(rows_p, C)[:rows]


def bn_scale_shift(gamma, beta, col_sum, col_sq, count, eps=_BN_EPS):
    mean = col_sum / count
    var = jnp.maximum(col_sq / count - mean * mean, 0.0)   # biased variance (PyTorch BN)
    scale = gamma * jax.lax.rsqrt(var + eps)
    shift = beta - mean * scale
    return scale, shift


# ------------------------------------------------------------------------------------------
# BasicBlock forward (mirrors the PyTorch module, is_se=False)
# ------------------------------------------------------------------------------------------
def basic_block_forward(params, x_nchw):
    stride = params['stride']
    x = jnp.transpose(x_nchw, (0, 2, 3, 1))                 # NCHW -> NHWC
    Nb = x.shape[0]
    Cout = params['w1'].shape[-1]

    # conv1 -> bn -> relu  (BN stats come fused out of the conv matmul)
    o1, OH1, OW1, s1, q1 = conv2d_bn_stats(x, params['w1'], stride, 1)
    M1 = Nb * OH1 * OW1
    sc1, sh1 = bn_scale_shift(params['bn_g'], params['bn_b'], s1, q1, M1)
    h1 = affine_pallas(o1, sc1, sh1, relu=True, rows=M1, out_dtype=jnp.bfloat16)
    h1 = h1.reshape(Nb, OH1, OW1, Cout)

    # conv2 -> bn  (same gamma/beta as after conv1, fresh batch statistics)
    o2, OH2, OW2, s2, q2 = conv2d_bn_stats(h1, params['w2'], 1, 1)
    M2 = Nb * OH2 * OW2
    sc2, sh2 = bn_scale_shift(params['bn_g'], params['bn_b'], s2, q2, M2)

    # shortcut: identity (stride == 1) or 1x1 conv + BN (BN folded into the final add kernel)
    if 'w_sc' in params:
        osc, _, _, ss, qs = conv2d_bn_stats(x, params['w_sc'], stride, 0)
        res = osc
        res_scale, res_shift = bn_scale_shift(params['bn_sc_g'], params['bn_sc_b'], ss, qs, M2)
    else:
        res = x.reshape(Nb * x.shape[1] * x.shape[2], x.shape[3])
        res_scale = jnp.ones((Cout,), jnp.float32)
        res_shift = jnp.zeros((Cout,), jnp.float32)

    # out = relu(bn(conv2) + shortcut)
    out = affine_pallas(o2, sc2, sh2, residual=res, res_scale=res_scale,
                        res_shift=res_shift, relu=True, rows=M2, out_dtype=jnp.float32)
    out = out.reshape(Nb, OH2, OW2, Cout)
    return jnp.transpose(out, (0, 3, 1, 2))                 # NHWC -> NCHW


# ------------------------------------------------------------------------------------------
# Parameter init (PyTorch defaults: BN gamma=1 beta=0; conv Kaiming-style, bias-free)
# ------------------------------------------------------------------------------------------
def init_basic_block(key, in_channels, out_channels, strides):
    k1, k2, k3 = jax.random.split(key, 3)

    def conv_w(k, kh, kw, cin, cout):
        fan_in = kh * kw * cin
        return jax.random.normal(k, (kh, kw, cin, cout), jnp.float32) * (2.0 / fan_in) ** 0.5

    p = {
        'stride': strides,
        'w1': conv_w(k1, 3, 3, in_channels, out_channels),
        'w2': conv_w(k2, 3, 3, out_channels, out_channels),
        'bn_g': jnp.ones((out_channels,), jnp.float32),
        'bn_b': jnp.zeros((out_channels,), jnp.float32),
    }
    if strides != 1:
        p['w_sc'] = conv_w(k3, 1, 1, in_channels, out_channels)
        p['bn_sc_g'] = jnp.ones((out_channels,), jnp.float32)
        p['bn_sc_b'] = jnp.zeros((out_channels,), jnp.float32)
    return p


if __name__ == "__main__":
    key = jax.random.PRNGKey(0)
    kp1, kx1, kp2, kx2 = jax.random.split(key, 4)

    # BasicBlock(64, 64, strides=1): identity shortcut path
    p1 = init_basic_block(kp1, in_channels=64, out_channels=64, strides=1)
    xa = jax.random.normal(kx1, (2, 64, 16, 16), jnp.float32)       # PyTorch NCHW input
    out1 = jax.block_until_ready(jax.jit(functools.partial(basic_block_forward, p1))(xa))

    # BasicBlock(32, 64, strides=2): 1x1-conv + BN shortcut path
    p2 = init_basic_block(kp2, in_channels=32, out_channels=64, strides=2)
    xb = jax.random.normal(kx2, (2, 32, 16, 16), jnp.float32)
    out2 = jax.block_until_ready(jax.jit(functools.partial(basic_block_forward, p2))(xb))

    assert out1.shape == (2, 64, 16, 16), out1.shape
    assert out2.shape == (2, 64, 8, 8), out2.shape
    for o in (out1, out2):
        assert bool(jnp.all(jnp.isfinite(o)))
        assert bool(jnp.all(o >= 0.0))        # block output is post-ReLU
    print("KERNEL_OK")
</pallas_src>

<mosaic_0001>
module attributes {stable_mosaic.version = 11 : i64} {
  func.func @_matmul_stats_kernel(%arg0: i32, %arg1: i32, %arg2: memref<256x640xbf16, #tpu.memory_space<vmem>>, %arg3: memref<640x64xbf16, #tpu.memory_space<vmem>>, %arg4: memref<256x64xbf16, #tpu.memory_space<vmem>>, %arg5: memref<1x8x64xf32, #tpu.memory_space<vmem>>, %arg6: memref<256x64xf32, #tpu.memory_space<vmem>>) attributes {dimension_semantics = [#tpu.dimension_semantics<parallel>, #tpu.dimension_semantics<arbitrary>], iteration_bounds = array<i64: 2, 1>, scalar_prefetch = 0 : i64, scratch_operands = 1 : i64, tpu.core_type = #tpu.core_type<tc>, window_params = [{transform_indices = @transform_0, window_bounds = array<i64: 256, 640>}, {transform_indices = @transform_1, window_bounds = array<i64: 640, 64>}, {transform_indices = @transform_2, window_bounds = array<i64: 256, 64>}, {transform_indices = @transform_3, window_bounds = array<i64: 1, 8, 64>}]} {
    %c0_i32 = arith.constant 0 : i32
    %0 = arith.cmpi eq, %arg1, %c0_i32 : i32
    %1 = arith.extui %0 : i1 to i32
    %c0_i32_0 = arith.constant 0 : i32
    %2 = arith.cmpi ne, %1, %c0_i32_0 : i32
    scf.if %2 {
      %cst_10 = arith.constant 0.000000e+00 : f32
      %12 = vector.broadcast %cst_10 : f32 to vector<256x64xf32>
      %c0_11 = arith.constant 0 : index
      %c0_12 = arith.constant 0 : index
      %13 = vector.load %arg6[%c0_11, %c0_12] : memref<256x64xf32, #tpu.memory_space<vmem>>, vector<256x64xf32>
      tpu.vector_store %arg6[%c0_11, %c0_12], %12 {strides = array<i32>} : memref<256x64xf32, #tpu.memory_space<vmem>>, vector<256x64xf32>,
    } else {
    }
    %c0 = arith.constant 0 : index
    %c0_1 = arith.constant 0 : index
    %3 = vector.load %arg6[%c0, %c0_1] : memref<256x64xf32, #tpu.memory_space<vmem>>, vector<256x64xf32>
    %c0_2 = arith.constant 0 : index
    %c0_3 = arith.constant 0 : index
    %4 = vector.load %arg2[%c0_2, %c0_3] : memref<256x640xbf16, #tpu.memory_space<vmem>>, vector<256x640xbf16>
    %c0_4 = arith.constant 0 : index
    %c0_5 = arith.constant 0 : index
    %5 = vector.load %arg3[%c0_4, %c0_5] : memref<640x64xbf16, #tpu.memory_space<vmem>>, vector<640x64xbf16>
    %cst = arith.constant dense<0.000000e+00> : vector<256x64xf32>
    %6 = tpu.matmul %4, %5, %cst {dimension_numbers = #tpu.dot_dimension_numbers<[1], [0], [0], [1], [0, 0, 1, 1], [], []>} : vector<256x640xbf16>, vector<640x64xbf16>, vector<256x64xf32> -> vector<256x64xf32>
    %7 = arith.addf %3, %6 : vector<256x64xf32>
    %c0_6 = arith.constant 0 : index
    %c0_7 = arith.constant 0 : index
    %8 = vector.load %arg6[%c0_6, %c0_7] : memref<256x64xf32, #tpu.memory_space<vmem>>, vector<256x64xf32>
    tpu.vector_store %arg6[%c0_6, %c0_7], %7 {strides = array<i32>} : memref<256x64xf32, #tpu.memory_space<vmem>>, vector<256x64xf32>,
    %c0_i32_8 = arith.constant 0 : i32
    %9 = arith.cmpi eq, %arg1, %c0_i32_8 : i32
    %10 = arith.extui %9 : i1 to i32
    %c0_i32_9 = arith.constant 0 : i32
    %11 = arith.cmpi ne, %10, %c0_i32_9 : i32
    scf.if %11 {
      %c0_10 = arith.constant 0 : index
      %c0_11 = arith.constant 0 : index
      %12 = vector.load %arg6[%c0_10, %c0_11] : memref<256x64xf32, #tpu.memory_space<vmem>>, vector<256x64xf32>
      %13 = arith.truncf %12 : vector<256x64xf32> to vector<256x64xbf16>
      %c0_12 = arith.constant 0 : index
      %c0_13 = arith.constant 0 : index
      %14 = vector.load %arg4[%c0_12, %c0_13] : memref<256x64xbf16, #tpu.memory_space<vmem>>, vector<256x64xbf16>
      tpu.vector_store %arg4[%c0_12, %c0_13], %13 {strides = array<i32>} : memref<256x64xbf16, #tpu.memory_space<vmem>>, vector<256x64xbf16>,
      %cst_14 = arith.constant dense<0.000000e+00> : vector<64xf32>
      %15 = vector.multi_reduction <add>, %12, %cst_14 [0] : vector<256x64xf32> to vector<64xf32>
      %16 = vector.shape_cast %15 : vector<64xf32> to vector<1x64xf32>
      %17 = arith.mulf %12, %12 : vector<256x64xf32>
      %cst_15 = arith.constant dense<0.000000e+00> : vector<64xf32>
      %18 = vector.multi_reduction <add>, %17, %cst_15 [0] : vector<256x64xf32> to vector<64xf32>
      %19 = vector.shape_cast %18 : vector<64xf32> to vector<1x64xf32>
      %20 = tpu.iota {dimensions = array<i32: 0>} : vector<8x64xi32>
      %c0_i32_16 = arith.constant 0 : i32
      %21 = vector.broadcast %c0_i32_16 : i32 to vector<8x64xi32>
      %22 = arith.cmpi eq, %20, %21 : vector<8x64xi32>
      %cst_17 = arith.constant 0.000000e+00 : f32
      %23 = vector.shape_cast %16 : vector<1x64xf32> to vector<1x64xf32>
      %24 = vector.broadcast %23 : vector<1x64xf32> to vector<8x64xf32>
      %25 = vector.broadcast %cst_17 : f32 to vector<8x64xf32>
      %26 = arith.select %22, %24, %25 : vector<8x64xi1>, vector<8x64xf32>
      %c1_i32 = arith.constant 1 : i32
      %27 = vector.broadcast %c1_i32 : i32 to vector<8x64xi32>
      %28 = arith.cmpi eq, %20, %27 : vector<8x64xi32>
      %cst_18 = arith.constant 0.000000e+00 : f32
      %29 = vector.shape_cast %19 : vector<1x64xf32> to vector<1x64xf32>
      %30 = vector.broadcast %29 : vector<1x64xf32> to vector<8x64xf32>
      %31 = vector.broadcast %cst_18 : f32 to vector<8x64xf32>
      %32 = arith.select %28, %30, %31 : vector<8x64xi1>, vector<8x64xf32>
      %33 = arith.addf %26, %32 : vector<8x64xf32>
      %34 = vector.shape_cast %33 : vector<8x64xf32> to vector<1x8x64xf32>
      %c0_19 = arith.constant 0 : index
      %c0_20 = arith.constant 0 : index
      %c0_21 = arith.constant 0 : index
      %35 = vector.load %arg5[%c0_19, %c0_20, %c0_21] : memref<1x8x64xf32, #tpu.memory_space<vmem>>, vector<1x8x64xf32>
      tpu.vector_store %arg5[%c0_19, %c0_20, %c0_21], %34 {strides = array<i32>} : memref<1x8x64xf32, #tpu.memory_space<vmem>>, vector<1x8x64xf32>,
    } else {
    }
    return
  }
  func.func @transform_0(%arg0: i32, %arg1: i32) -> (i32, i32) {
    %c0_i32 = arith.constant 0 : i32
    return %arg0, %arg1 : i32, i32
  }
  func.func @transform_1(%arg0: i32, %arg1: i32) -> (i32, i32) {
    %c0_i32 = arith.constant 0 : i32
    %c0_i32_0 = arith.constant 0 : i32
    return %arg1, %c0_i32 : i32, i32
  }
  func.func @transform_2(%arg0: i32, %arg1: i32) -> (i32, i32) {
    %c0_i32 = arith.constant 0 : i32
    %c0_i32_0 = arith.constant 0 : i32
    return %arg0, %c0_i32 : i32, i32
  }
  func.func @transform_3(%arg0: i32, %arg1: i32) -> (i32, i32, i32) {
    %c0_i32 = arith.constant 0 : i32
    %c0_i32_0 = arith.constant 0 : i32
    %c0_i32_1 = arith.constant 0 : i32
    return %arg0, %c0_i32, %c0_i32_0 : i32, i32, i32
  }
}

module attributes {stable_mosaic.version = 11 : i64} {
  func.func @_affine_kernel(%arg0: i32, %arg1: memref<128x128xbf16, #tpu.memory_space<vmem>>, %arg2: memref<1x128xf32, #tpu.memory_space<vmem>>, %arg3: memref<1x128xf32, #tpu.memory_space<vmem>>, %arg4: memref<128x128xbf16, #tpu.memory_space<vmem>>) attributes {dimension_semantics = [#tpu.dimension_semantics<parallel>], iteration_bounds = array<i64: 2>, scalar_prefetch = 0 : i64, scratch_operands = 0 : i64, tpu.core_type = #tpu.core_type<tc>, window_params = [{transform_indices = @transform_0, window_bounds = array<i64: 128, 128>}, {pipeline_mode = #tpu.pipeline_mode<synchronous>, transform_indices = @transform_1, window_bounds = array<i64: 1, 128>}, {pipeline_mode = #tpu.pipeline_mode<synchronous>, transform_indices = @transform_2, window_bounds = array<i64: 1, 128>}, {transform_indices = @transform_3, window_bounds = array<i64: 128, 128>}]} {
    %c0 = arith.constant 0 : index
    %c0_0 = arith.constant 0 : index
    %0 = vector.load %arg1[%c0, %c0_0] : memref<128x128xbf16, #tpu.memory_space<vmem>>, vector<128x128xbf16>
    %1 = arith.extf %0 : vector<128x128xbf16> to vector<128x128xf32>
    %c0_1 = arith.constant 0 : index
    %c0_2 = arith.constant 0 : index
    %2 = vector.load %arg2[%c0_1, %c0_2] : memref<1x128xf32, #tpu.memory_space<vmem>>, vector<1x128xf32>
    %3 = vector.broadcast %2 : vector<1x128xf32> to vector<128x128xf32>
    %4 = arith.mulf %1, %3 : vector<128x128xf32>
    %c0_3 = arith.constant 0 : index
    %c0_4 = arith.constant 0 : index
    %5 = vector.load %arg3[%c0_3, %c0_4] : memref<1x128xf32, #tpu.memory_space<vmem>>, vector<1x128xf32>
    %6 = vector.broadcast %5 : vector<1x128xf32> to vector<128x128xf32>
    %7 = arith.addf %4, %6 : vector<128x128xf32>
    %cst = arith.constant 0.000000e+00 : f32
    %8 = vector.broadcast %cst : f32 to vector<128x128xf32>
    %9 = arith.maximumf %7, %8 : vector<128x128xf32>
    %10 = arith.truncf %9 : vector<128x128xf32> to vector<128x128xbf16>
    %c0_5 = arith.constant 0 : index
    %c0_6 = arith.constant 0 : index
    %11 = vector.load %arg4[%c0_5, %c0_6] : memref<128x128xbf16, #tpu.memory_space<vmem>>, vector<128x128xbf16>
    tpu.vector_store %arg4[%c0_5, %c0_6], %10 {strides = array<i32>} : memref<128x128xbf16, #tpu.memory_space<vmem>>, vector<128x128xbf16>,
    return
  }
  func.func @transform_0(%arg0: i32) -> (i32, i32) {
    %c0_i32 = arith.constant 0 : i32
    %c0_i32_0 = arith.constant 0 : i32
    return %arg0, %c0_i32 : i32, i32
  }
  func.func @transform_1(%arg0: i32) -> (i32, i32) {
    %c0_i32 = arith.constant 0 : i32
    %c0_i32_0 = arith.constant 0 : i32
    %c0_i32_1 = arith.constant 0 : i32
    return %c0_i32, %c0_i32_0 : i32, i32
  }
  func.func @transform_2(%arg0: i32) -> (i32, i32) {
    %c0_i32 = arith.constant 0 : i32
    %c0_i32_0 = arith.constant 0 : i32
    %c0_i32_1 = arith.constant 0 : i32
    return %c0_i32, %c0_i32_0 : i32, i32
  }
  func.func @transform_3(%arg0: i32) -> (i32, i32) {
    %c0_i32 = arith.constant 0 : i32
    %c0_i32_0 = arith.constant 0 : i32
    return %arg0, %c0_i32 : i32, i32
  }
}

module attributes {stable_mosaic.version = 11 : i64} {
  func.func @_affine_res_kernel(%arg0: i32, %arg1: memref<128x128xbf16, #tpu.memory_space<vmem>>, %arg2: memref<1x128xf32, #tpu.memory_space<vmem>>, %arg3: memref<1x128xf32, #tpu.memory_space<vmem>>, %arg4: memref<128x128xf32, #tpu.memory_space<vmem>>, %arg5: memref<1x128xf32, #tpu.memory_space<vmem>>, %arg6: memref<1x128xf32, #tpu.memory_space<vmem>>, %arg7: memref<128x128xf32, #tpu.memory_space<vmem>>) attributes {dimension_semantics = [#tpu.dimension_semantics<parallel>], iteration_bounds = array<i64: 2>, scalar_prefetch = 0 : i64, scratch_operands = 0 : i64, tpu.core_type = #tpu.core_type<tc>, window_params = [{transform_indices = @transform_0, window_bounds = array<i64: 128, 128>}, {pipeline_mode = #tpu.pipeline_mode<synchronous>, transform_indices = @transform_1, window_bounds = array<i64: 1, 128>}, {pipeline_mode = #tpu.pipeline_mode<synchronous>, transform_indices = @transform_2, window_bounds = array<i64: 1, 128>}, {transform_indices = @transform_3, window_bounds = array<i64: 128, 128>}, {pipeline_mode = #tpu.pipeline_mode<synchronous>, transform_indices = @transform_4, window_bounds = array<i64: 1, 128>}, {pipeline_mode = #tpu.pipeline_mode<synchronous>, transform_indices = @transform_5, window_bounds = array<i64: 1, 128>}, {transform_indices = @transform_6, window_bounds = array<i64: 128, 128>}]} {
    %c0 = arith.constant 0 : index
    %c0_0 = arith.constant 0 : index
    %0 = vector.load %arg1[%c0, %c0_0] : memref<128x128xbf16, #tpu.memory_space<vmem>>, vector<128x128xbf16>
    %1 = arith.extf %0 : vector<128x128xbf16> to vector<128x128xf32>
    %c0_1 = arith.constant 0 : index
    %c0_2 = arith.constant 0 : index
    %2 = vector.load %arg2[%c0_1, %c0_2] : memref<1x128xf32, #tpu.memory_space<vmem>>, vector<1x128xf32>
    %3 = vector.broadcast %2 : vector<1x128xf32> to vector<128x128xf32>
    %4 = arith.mulf %1, %3 : vector<128x128xf32>
    %c0_3 = arith.constant 0 : index
    %c0_4 = arith.constant 0 : index
    %5 = vector.load %arg3[%c0_3, %c0_4] : memref<1x128xf32, #tpu.memory_space<vmem>>, vector<1x128xf32>
    %6 = vector.broadcast %5 : vector<1x128xf32> to vector<128x128xf32>
    %7 = arith.addf %4, %6 : vector<128x128xf32>
    %c0_5 = arith.constant 0 : index
    %c0_6 = arith.constant 0 : index
    %8 = vector.load %arg4[%c0_5, %c0_6] : memref<128x128xf32, #tpu.memory_space<vmem>>, vector<128x128xf32>
    %c0_7 = arith.constant 0 : index
    %c0_8 = arith.constant 0 : index
    %9 = vector.load %arg5[%c0_7, %c0_8] : memref<1x128xf32, #tpu.memory_space<vmem>>, vector<1x128xf32>
    %10 = vector.broadcast %9 : vector<1x128xf32> to vector<128x128xf32>
    %11 = arith.mulf %8, %10 : vector<128x128xf32>
    %12 = arith.addf %7, %11 : vector<128x128xf32>
    %c0_9 = arith.constant 0 : index
    %c0_10 = arith.constant 0 : index
    %13 = vector.load %arg6[%c0_9, %c0_10] : memref<1x128xf32, #tpu.memory_space<vmem>>, vector<1x128xf32>
    %14 = vector.broadcast %13 : vector<1x128xf32> to vector<128x128xf32>
    %15 = arith.addf %12, %14 : vector<128x128xf32>
    %cst = arith.constant 0.000000e+00 : f32
    %16 = vector.broadcast %cst : f32 to vector<128x128xf32>
    %17 = arith.maximumf %15, %16 : vector<128x128xf32>
    %c0_11 = arith.constant 0 : index
    %c0_12 = arith.constant 0 : index
    %18 = vector.load %arg7[%c0_11, %c0_12] : memref<128x128xf32, #tpu.memory_space<vmem>>, vector<128x128xf32>
    tpu.vector_store %arg7[%c0_11, %c0_12], %17 {strides = array<i32>} : memref<128x128xf32, #tpu.memory_space<vmem>>, vector<128x128xf32>,
    return
  }
  func.func @transform_0(%arg0: i32) -> (i32, i32) {
    %c0_i32 = arith.constant 0 : i32
    %c0_i32_0 = arith.constant 0 : i32
    return %arg0, %c0_i32 : i32, i32
  }
  func.func @transform_1(%arg0: i32) -> (i32, i32) {
    %c0_i32 = arith.constant 0 : i32
    %c0_i32_0 = arith.constant 0 : i32
    %c0_i32_1 = arith.constant 0 : i32
    return %c0_i32, %c0_i32_0 : i32, i32
  }
  func.func @transform_2(%arg0: i32) -> (i32, i32) {
    %c0_i32 = arith.constant 0 : i32
    %c0_i32_0 = arith.constant 0 : i32
    %c0_i32_1 = arith.constant 0 : i32
    return %c0_i32, %c0_i32_0 : i32, i32
  }
  func.func @transform_3(%arg0: i32) -> (i32, i32) {
    %c0_i32 = arith.constant 0 : i32
    %c0_i32_0 = arith.constant 0 : i32
    return %arg0, %c0_i32 : i32, i32
  }
  func.func @transform_4(%arg0: i32) -> (i32, i32) {
    %c0_i32 = arith.constant 0 : i32
    %c0_i32_0 = arith.constant 0 : i32
    %c0_i32_1 = arith.constant 0 : i32
    return %c0_i32, %c0_i32_0 : i32, i32
  }
  func.func @transform_5(%arg0: i32) -> (i32, i32) {
    %c0_i32 = arith.constant 0 : i32
    %c0_i32_0 = arith.constant 0 : i32
    %c0_i32_1 = arith.constant 0 : i32
    return %c0_i32, %c0_i32_0 : i32, i32
  }
  func.func @transform_6(%arg0: i32) -> (i32, i32) {
    %c0_i32 = arith.constant 0 : i32
    %c0_i32_0 = arith.constant 0 : i32
    return %arg0, %c0_i32 : i32, i32
  }
}

</mosaic_0001>

<llo_original>
// kernel: tile.27
$region0: #{tile.27}
  #allocation0 [shape = 's32[1]{0}', space=sflag, size = 0x4, scoped, tag = 'scoped memory for tile.27']
  %s0 = inlined_call_operand.vmem [shape: f32[64], index: 0, kind: input, shape index: {}]
  %s1 = inlined_call_operand.vmem [shape: f32[2,64], index: 1, kind: output, shape index: {}]
  // Predicated region
  $region2: #{tile.27} parent=0 // pred_check
    _
  $region3: #{tile.27} parent=0 // pred_check_branch
    %3 = sbr.rel (0) target = $region5
  $region4: #{tile.27} parent=0 // pred_region
    _
  $region5: #{tile.27} parent=0 // pred_fallthru
    _
  %v4 = vld [vmem:[%s0] ss:$0 sm:$0xff]
  %5 = vst [vmem:[%s1] sm:$0x3] %v4

// kernel: tile.28
$region0: #{tile.28}
  %s0 = inlined_call_operand.vmem [shape: f32[2,64], index: 0, kind: input, shape index: {}]
  %s1 = inlined_call_operand.vmem [shape: f32[1,128], index: 1, kind: output, shape index: {}]
  $region1: #{tile.28} parent=0
    #allocation0 [shape = 'u8[4096]{0}', space=vmem, size = 0x1000, scoped, tag = 'scoped mem for output reshape']
    #allocation1 [shape = 'u8[4096]{0}', space=vmem, size = 0x1000, scoped, tag = 'scoped mem for input reshape']
    %s3 = ssub.s32 4, 1
    %v4 = vld [vmem:[%s0] sm:%s3]
    %5 = vst [vmem:[#allocation1] sm:%s3] %v4
    %v6 = vld [vmem:[#allocation1] sm:$0x1]
    %vm7 = vcmask 523264
    %8 = vst.msk [vmem:[#allocation0] sm:$0x1] %vm7, %v6
    %s9 = scalar_lea.vmem [#allocation1], 1
    %v10 = vld [vmem:[%s9] sm:$0x1]
    %11 = vrot.lane.b32.xlu0 %v10, 64
    %v12 = vpop.permute.xlu0 %11
    %vm13 = vcmask 1048064
    %14 = vst.msk [vmem:[#allocation0] sm:$0x1] %vm13, %v12
    %s16 = ssub.s32 2, 1
    %v17 = vld [vmem:[#allocation0] sm:%s16]
    %s19 = ssub.s32 2, 1
    %20 = vst [vmem:[%s1] sm:%s19] %v17

// kernel: basic_block_forward.5
$region0: #{basic_block_forward.5}
  #allocation0 [shape = 'u32[]', space=smem, size = 0x4, offset = 0x4, fixed_abs, tag = 'smem constant byte address 0x4 - core index']
  #allocation1 [shape = 'u32[72,128]{1,0:T(1,128)}', space=vmem, size = 0x9000, scoped, tag = 'internal scratch']
  %s0 = inlined_call_operand.vmem [shape: bf16[256,128], index: 0, kind: input, shape index: {}]
  %s1 = inlined_call_operand.vmem [shape: f32[1,128], index: 1, kind: input, shape index: {}]
  %s2 = inlined_call_operand.vmem [shape: f32[1,128], index: 2, kind: input, shape index: {}]
  %s3 = inlined_call_operand.vmem [shape: bf16[256,128], index: 3, kind: output, shape index: {}]
  %s4 = sld [smem:[#allocation0]]
  $region45: #{basic_block_forward.5} parent=0
    _
  %s6 = ssub.s32 1, %s4
  %s7 = scalar_select 0, %s6, %s4
  loop: start=0, step=1, limit=4
  $region2: #{basic_block_forward.5} parent=0 // loop_pre_header
    _
  $region3: #{basic_block_forward.5} parent=0 // loop_header
    %s9 = sphi 0, %s13
    %p10 = scmp.ge.s32.totalorder %s9, 4
    %s19 = sphi 0, %s21
    %s22 = sphi 0, %s19
    %s23 = sphi 0, %s22
    %s39 = sphi 0, %s23
    %s43 = sphi 0, %s43
    %s45 = sphi 0, %s43
    %s46 = sphi 0, %s45
    %s60 = sphi 0, %s46
    %s64 = sphi 0, %s64
    %s66 = sphi 0, %s64
    %s67 = sphi 0, %s66
    %s81 = sphi 0, %s67
    %s87 = sphi 0, %s89
    %s90 = sphi 0, %s87
    %s91 = sphi 0, %s90
    %s107 = sphi 0, %s91
  $region4: #{basic_block_forward.5} parent=0 // loop_header_branch
    %12 = sbr.rel (%p10) target = $region8
  $region5: #{basic_block_forward.5} parent=0 // loop_body
    %s14 = ssub.s32 %s9, 1
    %s15 = ssub.s32 %s9, 2
    %s16 = sadd.s32 %s9, 1
    %s17 = ssub.s32 %s9, %s16
    %p18 = scmp.eq.s32.totalorder %s17, 0
    %s20 = sadd.s32 %s19, 1
    %s21 = scalar_select %p18, %s19, %s20
    %p24 = pneg %p18
    %p25 = scmp.eq.s32.totalorder %s9, 1
    %p26 = por %p24, %p25
    %p27 = scmp.ne.s32.totalorder %s19, %s22
    %p28 = scmp.eq.s32.totalorder %s9, 0
    %p29 = por %p27, %p28
    %p30 = scmp.ne.s32.totalorder %s19, %s22
    %p31 = scmp.eq.s32.totalorder %s14, 1
    %p32 = por %p30, %p31
    %p33 = scmp.ne.s32.totalorder %s22, %s23
    %p34 = scmp.eq.s32.totalorder %s14, 0
    %p35 = por %p33, %p34
    %p36 = scmp.ne.s32.totalorder %s22, %s23
    %p37 = scmp.eq.s32.totalorder %s15, 1
    %p38 = por %p36, %p37
    %p40 = scmp.ne.s32.totalorder %s23, %s39
    %p41 = scmp.eq.s32.totalorder %s15, 0
    %p42 = por %p40, %p41
    %s44 = sadd.s32 %s43, 1
    %p47 = scmp.eq.s32.totalorder %s9, 1
    %p48 = scmp.ne.s32.totalorder %s43, %s45
    %p49 = scmp.eq.s32.totalorder %s9, 0
    %p50 = por %p48, %p49
    %p51 = scmp.ne.s32.totalorder %s43, %s45
    %p52 = scmp.eq.s32.totalorder %s14, 1
    %p53 = por %p51, %p52
    %p54 = scmp.ne.s32.totalorder %s45, %s46
    %p55 = scmp.eq.s32.totalorder %s14, 0
    %p56 = por %p54, %p55
    %p57 = scmp.ne.s32.totalorder %s45, %s46
    %p58 = scmp.eq.s32.totalorder %s15, 1
    %p59 = por %p57, %p58
    %p61 = scmp.ne.s32.totalorder %s46, %s60
    %p62 = scmp.eq.s32.totalorder %s15, 0
    %p63 = por %p61, %p62
    %s65 = sadd.s32 %s64, 1
    %p68 = scmp.eq.s32.totalorder %s9, 1
    %p69 = scmp.ne.s32.totalorder %s64, %s66
    %p70 = scmp.eq.s32.totalorder %s9, 0
    %p71 = por %p69, %p70
    %p72 = scmp.ne.s32.totalorder %s64, %s66
    %p73 = scmp.eq.s32.totalorder %s14, 1
    %p74 = por %p72, %p73
    %p75 = scmp.ne.s32.totalorder %s66, %s67
    %p76 = scmp.eq.s32.totalorder %s14, 0
    %p77 = por %p75, %p76
    %p78 = scmp.ne.s32.totalorder %s66, %s67
    %p79 = scmp.eq.s32.totalorder %s15, 1
    %p80 = por %p78, %p79
    %p82 = scmp.ne.s32.totalorder %s67, %s81
    %p83 = scmp.eq.s32.totalorder %s15, 0
    %p84 = por %p82, %p83
    %s85 = ssub.s32 %s9, %s16
    %p86 = scmp.eq.s32.totalorder %s85, 0
    %s88 = sadd.s32 %s87, 1
    %s89 = scalar_select %p86, %s87, %s88
    %p92 = pneg %p86
    %p93 = scmp.eq.s32.totalorder %s9, 1
    %p94 = por %p92, %p93
    %p95 = scmp.ne.s32.totalorder %s87, %s90
    %p96 = scmp.eq.s32.totalorder %s9, 0
    %p97 = por %p95, %p96
    %p98 = scmp.ne.s32.totalorder %s87, %s90
    %p99 = scmp.eq.s32.totalorder %s14, 1
    %p100 = por %p98, %p99
    %p101 = scmp.ne.s32.totalorder %s90, %s91
    %p102 = scmp.eq.s32.totalorder %s14, 0
    %p103 = por %p101, %p102
    %p104 = scmp.ne.s32.totalorder %s90, %s91
    %p105 = scmp.eq.s32.totalorder %s15, 1
    %p106 = por %p104, %p105
    %p108 = scmp.ne.s32.totalorder %s91, %s107
    %p109 = scmp.eq.s32.totalorder %s15, 0
    %p110 = por %p108, %p109
    %p111 = scmp.le.s32.totalorder 1, %s9
    %p112 = scmp.lt.s32.totalorder %s9, 3
    %p113 = pnand %p111, %p112
    %p114 = pneg %p113
    // Predicated region
    $region9: #{basic_block_forward.5} parent=5 // pred_check
      _
    $region10: #{basic_block_forward.5} parent=5 // pred_check_branch
      %116 = sbr.rel (%p113) target = $region12
    $region11: #{basic_block_forward.5} parent=5 // pred_region
      %s117 = ssub.s32 %s9, 1
      // Predicated region
      $region13: #{basic_block_forward.5} parent=11 // pred_check
        %p118 = pneg %p56
      $region14: #{basic_block_forward.5} parent=11 // pred_check_branch
        %120 = sbr.rel (%p118) target = $region16
      $region15: #{basic_block_forward.5} parent=11 // pred_region
        _
      $region16: #{basic_block_forward.5} parent=11 // pred_fallthru
        _
      // Predicated region
      $region17: #{basic_block_forward.5} parent=11 // pred_check
        %p121 = pneg %p77
      $region18: #{basic_block_forward.5} parent=11 // pred_check_branch
        %123 = sbr.rel (%p121) target = $region20
      $region19: #{basic_block_forward.5} parent=11 // pred_region
        _
      $region20: #{basic_block_forward.5} parent=11 // pred_fallthru
        _
    $region12: #{basic_block_forward.5} parent=5 // pred_fallthru
      _
    %p124 = scmp.lt.s32.totalorder %s9, 2
    // Predicated region
    $region21: #{basic_block_forward.5} parent=5 // pred_check
      %p125 = pneg %p124
    $region22: #{basic_block_forward.5} parent=5 // pred_check_branch
      %127 = sbr.rel (%p125) target = $region24
    $region23: #{basic_block_forward.5} parent=5 // pred_region
      // Predicated region
      $region25: #{basic_block_forward.5} parent=23 // pred_check
        %p128 = pneg %p29
      $region26: #{basic_block_forward.5} parent=23 // pred_check_branch
        %130 = sbr.rel (%p128) target = $region28
      $region27: #{basic_block_forward.5} parent=23 // pred_region
        %s131 = smul.u32 16, %s9
        %p132 = scmp.lt.s32.totalorder %s131, 31
        %s133 = scalar_select %p132, %s131, 31
        %s134 = smul.addr %s133, 4
        %s135 = scalar_lea.vmem %s0, %s134
        %s136 = smul.u32 16, %s9
      $region28: #{basic_block_forward.5} parent=23 // pred_fallthru
        _
    $region24: #{basic_block_forward.5} parent=5 // pred_fallthru
      _
    %p137 = scmp.le.s32.totalorder 1, %s9
    %p138 = scmp.lt.s32.totalorder %s9, 3
    %p139 = pnand %p137, %p138
    %p140 = pneg %p139
    // Predicated region
    $region29: #{basic_block_forward.5} parent=5 // pred_check
      _
    $region30: #{basic_block_forward.5} parent=5 // pred_check_branch
      %142 = sbr.rel (%p139) target = $region32
    $region31: #{basic_block_forward.5} parent=5 // pred_region
      %s143 = ssub.s32 %s9, 1
      %s144 = smul.u32 16, %s14
      %p145 = scmp.lt.s32.totalorder %s144, 31
      %s146 = scalar_select %p145, %s144, 31
      %s147 = smul.addr %s146, 4
      %s148 = scalar_lea.vmem %s0, %s147
      %p149 = pneg %p35
      %p150 = pneg %p32
      %p151 = pneg %p56
      %p152 = pneg %p53
      %p153 = pneg %p77
      %p154 = pneg %p74
      %p155 = pneg %p103
      %p156 = pneg %p100
      %s157 = smul.u32 16, %s14
      %p158 = scmp.lt.s32.totalorder %s157, 31
      %s159 = scalar_select %p158, %s157, 31
      %s160 = smul.addr %s159, 4
      %s161 = scalar_lea.vmem %s3, %s160
      %s162 = smul.u32 16, %s14
      %p163 = scmp.lt.s32.totalorder %s162, 31
      %s164 = scalar_select %p163, %s162, 31
      %s165 = smul.addr %s164, 4
      %s166 = scalar_lea.vmem %s0, %s165
      %s167 = smul.u32 16, %s14
      %s168 = smul.u32 16, %s14
      %p169 = scmp.lt.s32.totalorder %s168, 31
      %s170 = scalar_select %p169, %s168, 31
      %s171 = smul.addr %s170, 4
      %s172 = scalar_lea.vmem %s3, %s171
      %s173 = smul.u32 16, %s14
      %v174 = vld [vmem:[%s166] sm:$0xf]
      %v175 = vld [vmem:[%s166 + $0x4] sm:$0xf]
      %v176 = vld [vmem:[%s166 + $0x8] sm:$0xf]
      %v177 = vld [vmem:[%s166 + $0xc] sm:$0xf]
      %v178 = vld [vmem:[%s166 + $0x10] sm:$0xf]
      %v179 = vld [vmem:[%s166 + $0x14] sm:$0xf]
      %v180 = vld [vmem:[%s166 + $0x18] sm:$0xf]
      %v181 = vld [vmem:[%s166 + $0x1c] sm:$0xf]
      %v182 = vld [vmem:[%s166 + $0x20] sm:$0xf]
      %v183 = vld [vmem:[%s166 + $0x24] sm:$0xf]
      %v184 = vld [vmem:[%s166 + $0x28] sm:$0xf]
      %v185 = vld [vmem:[%s166 + $0x2c] sm:$0xf]
      %v186 = vld [vmem:[%s166 + $0x30] sm:$0xf]
      %v187 = vld [vmem:[%s166 + $0x34] sm:$0xf]
      %v188 = vld [vmem:[%s166 + $0x38] sm:$0xf]
      %v189 = vld [vmem:[%s166 + $0x3c] sm:$0xf]
      %v190 = vunpack.c.l.bf16 %v174
      %v191 = vunpack.c.l.bf16 %v175
      %v192 = vunpack.c.l.bf16 %v176
      %v193 = vunpack.c.l.bf16 %v177
      %v194 = vunpack.c.l.bf16 %v178
      %v195 = vunpack.c.l.bf16 %v179
      %v196 = vunpack.c.l.bf16 %v180
      %v197 = vunpack.c.l.bf16 %v181
      %v198 = vunpack.c.l.bf16 %v182
      %v199 = vunpack.c.l.bf16 %v183
      %v200 = vunpack.c.l.bf16 %v184
      %v201 = vunpack.c.l.bf16 %v185
      %v202 = vunpack.c.l.bf16 %v186
      %v203 = vunpack.c.l.bf16 %v187
      %v204 = vunpack.c.l.bf16 %v188
      %v205 = vunpack.c.l.bf16 %v189
      %v206 = vld [vmem:[%s1] sm:$0x1]
      %v208 = vperm.slane %v206, 0
      %v210 = vmul.f32 %v190, %v208
      %v211 = vmul.f32 %v191, %v208
      %v212 = vmul.f32 %v192, %v208
      %v213 = vmul.f32 %v193, %v208
      %v214 = vmul.f32 %v194, %v208
      %v215 = vmul.f32 %v195, %v208
      %v216 = vmul.f32 %v196, %v208
      %v217 = vmul.f32 %v197, %v208
      %v218 = vmul.f32 %v198, %v208
      %v219 = vmul.f32 %v199, %v208
      %v220 = vmul.f32 %v200, %v208
      %v221 = vmul.f32 %v201, %v208
      %v222 = vmul.f32 %v202, %v208
      %v223 = vmul.f32 %v203, %v208
      %v224 = vmul.f32 %v204, %v208
      %v225 = vmul.f32 %v205, %v208
      %v226 = vld [vmem:[%s2] sm:$0x1]
      %v228 = vperm.slane %v226, 0
      %v230 = vadd.f32 %v210, %v228
      %v231 = vadd.f32 %v211, %v228
      %v232 = vadd.f32 %v212, %v228
      %v233 = vadd.f32 %v213, %v228
      %v234 = vadd.f32 %v214, %v228
      %v235 = vadd.f32 %v215, %v228
      %v236 = vadd.f32 %v216, %v228
      %v237 = vadd.f32 %v217, %v228
      %v238 = vadd.f32 %v218, %v228
      %v239 = vadd.f32 %v219, %v228
      %v240 = vadd.f32 %v220, %v228
      %v241 = vadd.f32 %v221, %v228
      %v242 = vadd.f32 %v222, %v228
      %v243 = vadd.f32 %v223, %v228
      %v244 = vadd.f32 %v224, %v228
      %v245 = vadd.f32 %v225, %v228
      %v246 = vmax.f32 %v230, 0.0
      %v247 = vmax.f32 %v231, 0.0
      %v248 = vmax.f32 %v232, 0.0
      %v249 = vmax.f32 %v233, 0.0
      %v250 = vmax.f32 %v234, 0.0
      %v251 = vmax.f32 %v235, 0.0
      %v252 = vmax.f32 %v236, 0.0
      %v253 = vmax.f32 %v237, 0.0
      %v254 = vmax.f32 %v238, 0.0
      %v255 = vmax.f32 %v239, 0.0
      %v256 = vmax.f32 %v240, 0.0
      %v257 = vmax.f32 %v241, 0.0
      %v258 = vmax.f32 %v242, 0.0
      %v259 = vmax.f32 %v243, 0.0
      %v260 = vmax.f32 %v244, 0.0
      %v261 = vmax.f32 %v245, 0.0
      %v262 = vpack.c.bf16 %v246, %v246
      %v263 = vpack.c.bf16 %v247, %v247
      %v264 = vpack.c.bf16 %v248, %v248
      %v265 = vpack.c.bf16 %v249, %v249
      %v266 = vpack.c.bf16 %v250, %v250
      %v267 = vpack.c.bf16 %v251, %v251
      %v268 = vpack.c.bf16 %v252, %v252
      %v269 = vpack.c.bf16 %v253, %v253
      %v270 = vpack.c.bf16 %v254, %v254
      %v271 = vpack.c.bf16 %v255, %v255
      %v272 = vpack.c.bf16 %v256, %v256
      %v273 = vpack.c.bf16 %v257, %v257
      %v274 = vpack.c.bf16 %v258, %v258
      %v275 = vpack.c.bf16 %v259, %v259
      %v276 = vpack.c.bf16 %v260, %v260
      %v277 = vpack.c.bf16 %v261, %v261
      %278 = vst [vmem:[%s172] sm:$0xf] %v262
      %279 = vst [vmem:[%s172 + $0x4] sm:$0xf] %v263
      %280 = vst [vmem:[%s172 + $0x8] sm:$0xf] %v264
      %281 = vst [vmem:[%s172 + $0xc] sm:$0xf] %v265
      %282 = vst [vmem:[%s172 + $0x10] sm:$0xf] %v266
      %283 = vst [vmem:[%s172 + $0x14] sm:$0xf] %v267
      %284 = vst [vmem:[%s172 + $0x18] sm:$0xf] %v268
      %285 = vst [vmem:[%s172 + $0x1c] sm:$0xf] %v269
      %286 = vst [vmem:[%s172 + $0x20] sm:$0xf] %v270
      %287 = vst [vmem:[%s172 + $0x24] sm:$0xf] %v271
      %288 = vst [vmem:[%s172 + $0x28] sm:$0xf] %v272
      %289 = vst [vmem:[%s172 + $0x2c] sm:$0xf] %v273
      %290 = vst [vmem:[%s172 + $0x30] sm:$0xf] %v274
      %291 = vst [vmem:[%s172 + $0x34] sm:$0xf] %v275
      %292 = vst [vmem:[%s172 + $0x38] sm:$0xf] %v276
      %293 = vst [vmem:[%s172 + $0x3c] sm:$0xf] %v277
      %s294 = smul.u32 16, %s14
      %p295 = scmp.lt.s32.totalorder %s294, 31
      %s296 = scalar_select %p295, %s294, 31
      %s297 = smul.addr %s296, 4
      %s298 = scalar_lea.vmem %s3, %s297
      // Predicated region
      $region33: #{basic_block_forward.5} parent=31 // pred_check
        %p299 = pneg %p100
      $region34: #{basic_block_forward.5} parent=31 // pred_check_branch
        %301 = sbr.rel (%p299) target = $region36
      $region35: #{basic_block_forward.5} parent=31 // pred_region
        %s302 = smul.u32 16, %s14
      $region36: #{basic_block_forward.5} parent=31 // pred_fallthru
        _
    $region32: #{basic_block_forward.5} parent=5 // pred_fallthru
      _
    %p303 = scmp.le.s32.totalorder 2, %s9
    // Predicated region
    $region37: #{basic_block_forward.5} parent=5 // pred_check
      %p304 = pneg %p303
    $region38: #{basic_block_forward.5} parent=5 // pred_check_branch
      %306 = sbr.rel (%p304) target = $region40
    $region39: #{basic_block_forward.5} parent=5 // pred_region
      %s307 = ssub.s32 %s9, 2
      // Predicated region
      $region41: #{basic_block_forward.5} parent=39 // pred_check
        %p308 = pneg %p106
      $region42: #{basic_block_forward.5} parent=39 // pred_check_branch
        %310 = sbr.rel (%p308) target = $region44
      $region43: #{basic_block_forward.5} parent=39 // pred_region
        %s311 = smul.u32 16, %s15
        %p312 = scmp.lt.s32.totalorder %s311, 31
        %s313 = scalar_select %p312, %s311, 31
        %s314 = smul.addr %s313, 4
        %s315 = scalar_lea.vmem %s3, %s314
      $region44: #{basic_block_forward.5} parent=39 // pred_fallthru
        _
    $region40: #{basic_block_forward.5} parent=5 // pred_fallthru
      _
  $region6: #{basic_block_forward.5} parent=0 // loop_footer
    %s13 = sadd.s32 1, %s9
  $region7: #{basic_block_forward.5} parent=0 // loop_footer_branch
    %8 = sbr.rel target = $region3
  $region8: #{basic_block_forward.5} parent=0 // loop_exit
    _

// kernel: basic_block_forward.4
$region0: #{basic_block_forward.4}
  #allocation0 [shape = 'u32[]', space=smem, size = 0x4, offset = 0x4, fixed_abs, tag = 'smem constant byte address 0x4 - core index']
  #allocation1 [shape = 'u32[72,128]{1,0:T(1,128)}', space=vmem, size = 0x9000, scoped, tag = 'internal scratch']
  #allocation2 [shape = 'f32[256,64]{1,0:T(8,128)}', space=vmem, size = 0x20000, scoped, tag = 'scratch operand']
  %s0 = inlined_call_operand.vmem [shape: bf16[512,640], index: 0, kind: input, shape index: {}]
  %s1 = inlined_call_operand.vmem [shape: bf16[640,64], index: 1, kind: input, shape index: {}]
  %s2 = inlined_call_operand.vmem [shape: bf16[512,64], index: 2, kind: output, shape index: {0}]
  %s3 = inlined_call_operand.vmem [shape: f32[2,8,64], index: 3, kind: output, shape index: {1}]
  %4 = xla_tuple %s2, %s3
  %s5 = sld [smem:[#allocation0]]
  $region57: #{basic_block_forward.4} parent=0
    _
  %s7 = ssub.s32 1, %s5
  %s8 = scalar_select 0, %s7, %s5
  loop: start=0, step=1, limit=4
  $region2: #{basic_block_forward.4} parent=0 // loop_pre_header
    _
  $region3: #{basic_block_forward.4} parent=0 // loop_header
    %s10 = sphi 0, %s14
    %p11 = scmp.ge.s32.totalorder %s10, 4
    %s17 = sphi 0, %s29
    %s18 = sphi 0, %s25
    %s19 = sphi 0, %s17
    %s20 = sphi 0, %s18
    %s21 = sphi 0, %s19
    %s22 = sphi 0, %s20
    %s34 = sphi 0, %s36
    %s37 = sphi 0, %s34
    %s38 = sphi 0, %s37
    %s54 = sphi 0, %s38
    %s60 = sphi 0, %s62
    %s63 = sphi 0, %s60
    %s64 = sphi 0, %s63
    %s80 = sphi 0, %s64
    %s86 = sphi 0, %s88
    %s89 = sphi 0, %s86
    %s90 = sphi 0, %s89
    %s106 = sphi 0, %s90
    %s112 = sphi 0, %s114
    %s115 = sphi 0, %s112
    %s116 = sphi 0, %s115
    %s132 = sphi 0, %s116
  $region4: #{basic_block_forward.4} parent=0 // loop_header_branch
    %13 = sbr.rel (%p11) target = $region8
  $region5: #{basic_block_forward.4} parent=0 // loop_body
    %s15 = ssub.s32 %s10, 1
    %s16 = ssub.s32 %s10, 2
    %s23 = sadd.s32 1, %s18
    %p24 = scmp.ge.s32.totalorder %s23, 1
    %s25 = scalar_select %p24, 0, %s23
    %s26 = sadd.s32 1, %s17
    %s27 = scalar_select %p24, %s26, %s17
    %p28 = scmp.ge.s32.totalorder %s27, 2
    %s29 = scalar_select %p28, 0, %s27
    %s30 = ssub.s32 %s17, %s29
    %s31 = ssub.s32 %s18, %s25
    %s32 = sor.u32 %s30, %s31
    %p33 = scmp.eq.s32.totalorder %s32, 0
    %s35 = sadd.s32 %s34, 1
    %s36 = scalar_select %p33, %s34, %s35
    %p39 = pneg %p33
    %p40 = scmp.eq.s32.totalorder %s10, 1
    %p41 = por %p39, %p40
    %p42 = scmp.ne.s32.totalorder %s34, %s37
    %p43 = scmp.eq.s32.totalorder %s10, 0
    %p44 = por %p42, %p43
    %p45 = scmp.ne.s32.totalorder %s34, %s37
    %p46 = scmp.eq.s32.totalorder %s15, 1
    %p47 = por %p45, %p46
    %p48 = scmp.ne.s32.totalorder %s37, %s38
    %p49 = scmp.eq.s32.totalorder %s15, 0
    %p50 = por %p48, %p49
    %p51 = scmp.ne.s32.totalorder %s37, %s38
    %p52 = scmp.eq.s32.totalorder %s16, 1
    %p53 = por %p51, %p52
    %p55 = scmp.ne.s32.totalorder %s38, %s54
    %p56 = scmp.eq.s32.totalorder %s16, 0
    %p57 = por %p55, %p56
    %s58 = ssub.s32 %s18, %s25
    %p59 = scmp.eq.s32.totalorder %s58, 0
    %s61 = sadd.s32 %s60, 1
    %s62 = scalar_select %p59, %s60, %s61
    %p65 = pneg %p59
    %p66 = scmp.eq.s32.totalorder %s10, 1
    %p67 = por %p65, %p66
    %p68 = scmp.ne.s32.totalorder %s60, %s63
    %p69 = scmp.eq.s32.totalorder %s10, 0
    %p70 = por %p68, %p69
    %p71 = scmp.ne.s32.totalorder %s60, %s63
    %p72 = scmp.eq.s32.totalorder %s15, 1
    %p73 = por %p71, %p72
    %p74 = scmp.ne.s32.totalorder %s63, %s64
    %p75 = scmp.eq.s32.totalorder %s15, 0
    %p76 = por %p74, %p75
    %p77 = scmp.ne.s32.totalorder %s63, %s64
    %p78 = scmp.eq.s32.totalorder %s16, 1
    %p79 = por %p77, %p78
    %p81 = scmp.ne.s32.totalorder %s64, %s80
    %p82 = scmp.eq.s32.totalorder %s16, 0
    %p83 = por %p81, %p82
    %s84 = ssub.s32 %s17, %s29
    %p85 = scmp.eq.s32.totalorder %s84, 0
    %s87 = sadd.s32 %s86, 1
    %s88 = scalar_select %p85, %s86, %s87
    %p91 = pneg %p85
    %p92 = scmp.eq.s32.totalorder %s10, 1
    %p93 = por %p91, %p92
    %p94 = scmp.ne.s32.totalorder %s86, %s89
    %p95 = scmp.eq.s32.totalorder %s10, 0
    %p96 = por %p94, %p95
    %p97 = scmp.ne.s32.totalorder %s86, %s89
    %p98 = scmp.eq.s32.totalorder %s15, 1
    %p99 = por %p97, %p98
    %p100 = scmp.ne.s32.totalorder %s89, %s90
    %p101 = scmp.eq.s32.totalorder %s15, 0
    %p102 = por %p100, %p101
    %p103 = scmp.ne.s32.totalorder %s89, %s90
    %p104 = scmp.eq.s32.totalorder %s16, 1
    %p105 = por %p103, %p104
    %p107 = scmp.ne.s32.totalorder %s90, %s106
    %p108 = scmp.eq.s32.totalorder %s16, 0
    %p109 = por %p107, %p108
    %s110 = ssub.s32 %s17, %s29
    %p111 = scmp.eq.s32.totalorder %s110, 0
    %s113 = sadd.s32 %s112, 1
    %s114 = scalar_select %p111, %s112, %s113
    %p117 = pneg %p111
    %p118 = scmp.eq.s32.totalorder %s10, 1
    %p119 = por %p117, %p118
    %p120 = scmp.ne.s32.totalorder %s112, %s115
    %p121 = scmp.eq.s32.totalorder %s10, 0
    %p122 = por %p120, %p121
    %p123 = scmp.ne.s32.totalorder %s112, %s115
    %p124 = scmp.eq.s32.totalorder %s15, 1
    %p125 = por %p123, %p124
    %p126 = scmp.ne.s32.totalorder %s115, %s116
    %p127 = scmp.eq.s32.totalorder %s15, 0
    %p128 = por %p126, %p127
    %p129 = scmp.ne.s32.totalorder %s115, %s116
    %p130 = scmp.eq.s32.totalorder %s16, 1
    %p131 = por %p129, %p130
    %p133 = scmp.ne.s32.totalorder %s116, %s132
    %p134 = scmp.eq.s32.totalorder %s16, 0
    %p135 = por %p133, %p134
    %p136 = scmp.le.s32.totalorder 1, %s10
    %p137 = scmp.lt.s32.totalorder %s10, 3
    %p138 = pnand %p136, %p137
    %p139 = pneg %p138
    // Predicated region
    $region9: #{basic_block_forward.4} parent=5 // pred_check
      _
    $region10: #{basic_block_forward.4} parent=5 // pred_check_branch
      %141 = sbr.rel (%p138) target = $region12
    $region11: #{basic_block_forward.4} parent=5 // pred_region
      %s142 = ssub.s32 %s10, 1
      // Predicated region
      $region13: #{basic_block_forward.4} parent=11 // pred_check
        %p143 = pneg %p76
      $region14: #{basic_block_forward.4} parent=11 // pred_check_branch
        %145 = sbr.rel (%p143) target = $region16
      $region15: #{basic_block_forward.4} parent=11 // pred_region
        %s146 = smul.u32 80, %s20
        %p147 = scmp.lt.s32.totalorder %s146, 79
        %s148 = scalar_select %p147, %s146, 79
        %s149 = smul.addr %s148, 4
        %s150 = scalar_lea.vmem %s1, %s149
        %s151 = smul.u32 80, %s20
      $region16: #{basic_block_forward.4} parent=11 // pred_fallthru
        _
    $region12: #{basic_block_forward.4} parent=5 // pred_fallthru
      _
    %p152 = scmp.lt.s32.totalorder %s10, 2
    // Predicated region
    $region17: #{basic_block_forward.4} parent=5 // pred_check
      %p153 = pneg %p152
    $region18: #{basic_block_forward.4} parent=5 // pred_check_branch
      %155 = sbr.rel (%p153) target = $region20
    $region19: #{basic_block_forward.4} parent=5 // pred_region
      // Predicated region
      $region21: #{basic_block_forward.4} parent=19 // pred_check
        %p156 = pneg %p44
      $region22: #{basic_block_forward.4} parent=19 // pred_check_branch
        %158 = sbr.rel (%p156) target = $region24
      $region23: #{basic_block_forward.4} parent=19 // pred_region
        %s159 = smul.u32 32, %s17
        %s160 = smul.u32 5, %s18
        %p161 = scmp.lt.s32.totalorder %s159, 63
        %s162 = scalar_select %p161, %s159, 63
        %p163 = scmp.lt.s32.totalorder %s160, 4
        %s164 = scalar_select %p163, %s160, 4
        %s165 = smul.addr %s162, 5
        %s166 = sadd.s32 %s164, %s165
        %s167 = smul.addr %s166, 4
        %s168 = scalar_lea.vmem %s0, %s167
        %s169 = smul.u32 32, %s17
        %s170 = smul.u32 5, %s18
      $region24: #{basic_block_forward.4} parent=19 // pred_fallthru
        _
    $region20: #{basic_block_forward.4} parent=5 // pred_fallthru
      _
    %p171 = scmp.le.s32.totalorder 1, %s10
    %p172 = scmp.lt.s32.totalorder %s10, 3
    %p173 = pnand %p171, %p172
    %p174 = pneg %p173
    // Predicated region
    $region25: #{basic_block_forward.4} parent=5 // pred_check
      _
    $region26: #{basic_block_forward.4} parent=5 // pred_check_branch
      %176 = sbr.rel (%p173) target = $region28
    $region27: #{basic_block_forward.4} parent=5 // pred_region
      %s177 = ssub.s32 %s10, 1
      %s178 = smul.u32 32, %s19
      %s179 = smul.u32 5, %s20
      %p180 = scmp.lt.s32.totalorder %s178, 63
      %s181 = scalar_select %p180, %s178, 63
      %p182 = scmp.lt.s32.totalorder %s179, 4
      %s183 = scalar_select %p182, %s179, 4
      %s184 = smul.addr %s181, 5
      %s185 = sadd.s32 %s183, %s184
      %s186 = smul.addr %s185, 4
      %s187 = scalar_lea.vmem %s0, %s186
      %p188 = pneg %p50
      %p189 = pneg %p47
      %s190 = smul.u32 80, %s20
      %p191 = scmp.lt.s32.totalorder %s190, 79
      %s192 = scalar_select %p191, %s190, 79
      %s193 = smul.addr %s192, 4
      %s194 = scalar_lea.vmem %s1, %s193
      %p195 = pneg %p76
      %p196 = pneg %p73
      %p197 = pneg %p102
      %p198 = pneg %p99
      %s199 = smul.u32 32, %s19
      %p200 = scmp.lt.s32.totalorder %s199, 63
      %s201 = scalar_select %p200, %s199, 63
      %s202 = smul.addr %s201, 4
      %s203 = scalar_lea.vmem %s2, %s202
      %p204 = pneg %p128
      %p205 = pneg %p125
      %p206 = scmp.lt.s32.totalorder %s19, 1
      %s207 = scalar_select %p206, %s19, 1
      %s208 = smul.addr %s207, 8
      %s209 = scalar_lea.vmem %s3, %s208
      %s210 = smul.u32 32, %s19
      %s211 = smul.u32 5, %s20
      %p212 = scmp.lt.s32.totalorder %s210, 63
      %s213 = scalar_select %p212, %s210, 63
      %p214 = scmp.lt.s32.totalorder %s211, 4
      %s215 = scalar_select %p214, %s211, 4
      %s216 = smul.addr %s213, 5
      %s217 = sadd.s32 %s215, %s216
      %s218 = smul.addr %s217, 4
      %s219 = scalar_lea.vmem %s0, %s218
      %s220 = smul.u32 32, %s19
      %s221 = smul.u32 5, %s20
      %s222 = smul.u32 80, %s20
      %p223 = scmp.lt.s32.totalorder %s222, 79
      %s224 = scalar_select %p223, %s222, 79
      %s225 = smul.addr %s224, 4
      %s226 = scalar_lea.vmem %s1, %s225
      %s227 = smul.u32 80, %s20
      %s228 = smul.u32 32, %s19
      %p229 = scmp.lt.s32.totalorder %s228, 63
      %s230 = scalar_select %p229, %s228, 63
      %s231 = smul.addr %s230, 4
      %s232 = scalar_lea.vmem %s2, %s231
      %s233 = smul.u32 32, %s19
      %p234 = scmp.lt.s32.totalorder %s19, 1
      %s235 = scalar_select %p234, %s19, 1
      %s236 = smul.addr %s235, 8
      %s237 = scalar_lea.vmem %s3, %s236
      %p238 = scmp.eq.s32.totalorder %s20, 0
      // Predicated region
      $region29: #{basic_block_forward.4} parent=27 // pred_check
        %p239 = pneg %p238
      $region30: #{basic_block_forward.4} parent=27 // pred_check_branch
        %241 = sbr.rel (%p239) target = $region32
      $region31: #{basic_block_forward.4} parent=27 // pred_region
        %vm242 = vcmask 523264
        %243 = vst.msk [vmem:[#allocation2] sm:$0xff] %vm242, 0.0
        %244 = vst.msk [vmem:[#allocation2 + $0x8] sm:$0xff] %vm242, 0.0
        %245 = vst.msk [vmem:[#allocation2 + $0x10] sm:$0xff] %vm242, 0.0
        %246 = vst.msk [vmem:[#allocation2 + $0x18] sm:$0xff] %vm242, 0.0
        %247 = vst.msk [vmem:[#allocation2 + $0x20] sm:$0xff] %vm242, 0.0
        %248 = vst.msk [vmem:[#allocation2 + $0x28] sm:$0xff] %vm242, 0.0
        %249 = vst.msk [vmem:[#allocation2 + $0x30] sm:$0xff] %vm242, 0.0
        %250 = vst.msk [vmem:[#allocation2 + $0x38] sm:$0xff] %vm242, 0.0
        %251 = vst.msk [vmem:[#allocation2 + $0x40] sm:$0xff] %vm242, 0.0
        %252 = vst.msk [vmem:[#allocation2 + $0x48] sm:$0xff] %vm242, 0.0
        %253 = vst.msk [vmem:[#allocation2 + $0x50] sm:$0xff] %vm242, 0.0
        %254 = vst.msk [vmem:[#allocation2 + $0x58] sm:$0xff] %vm242, 0.0
        %255 = vst.msk [vmem:[#allocation2 + $0x60] sm:$0xff] %vm242, 0.0
        %256 = vst.msk [vmem:[#allocation2 + $0x68] sm:$0xff] %vm242, 0.0
        %257 = vst.msk [vmem:[#allocation2 + $0x70] sm:$0xff] %vm242, 0.0
        %258 = vst.msk [vmem:[#allocation2 + $0x78] sm:$0xff] %vm242, 0.0
        %259 = vst.msk [vmem:[#allocation2 + $0x80] sm:$0xff] %vm242, 0.0
        %260 = vst.msk [vmem:[#allocation2 + $0x88] sm:$0xff] %vm242, 0.0
        %261 = vst.msk [vmem:[#allocation2 + $0x90] sm:$0xff] %vm242, 0.0
        %262 = vst.msk [vmem:[#allocation2 + $0x98] sm:$0xff] %vm242, 0.0
        %263 = vst.msk [vmem:[#allocation2 + $0xa0] sm:$0xff] %vm242, 0.0
        %264 = vst.msk [vmem:[#allocation2 + $0xa8] sm:$0xff] %vm242, 0.0
        %265 = vst.msk [vmem:[#allocation2 + $0xb0] sm:$0xff] %vm242, 0.0
        %266 = vst.msk [vmem:[#allocation2 + $0xb8] sm:$0xff] %vm242, 0.0
        %267 = vst.msk [vmem:[#allocation2 + $0xc0] sm:$0xff] %vm242, 0.0
        %268 = vst.msk [vmem:[#allocation2 + $0xc8] sm:$0xff] %vm242, 0.0
        %269 = vst.msk [vmem:[#allocation2 + $0xd0] sm:$0xff] %vm242, 0.0
        %270 = vst.msk [vmem:[#allocation2 + $0xd8] sm:$0xff] %vm242, 0.0
        %271 = vst.msk [vmem:[#allocation2 + $0xe0] sm:$0xff] %vm242, 0.0
        %272 = vst.msk [vmem:[#allocation2 + $0xe8] sm:$0xff] %vm242, 0.0
        %273 = vst.msk [vmem:[#allocation2 + $0xf0] sm:$0xff] %vm242, 0.0
        %274 = vst.msk [vmem:[#allocation2 + $0xf8] sm:$0xff] %vm242, 0.0
      $region32: #{basic_block_forward.4} parent=27 // pred_fallthru
        _
      %v275 = vld [vmem:[#allocation2] sm:$0xff]
      %v276 = vld [vmem:[#allocation2 + $0x8] sm:$0xff]
      %v277 = vld [vmem:[#allocation2 + $0x10] sm:$0xff]
      %v278 = vld [vmem:[#allocation2 + $0x18] sm:$0xff]
      %v279 = vld [vmem:[#allocation2 + $0x20] sm:$0xff]
      %v280 = vld [vmem:[#allocation2 + $0x28] sm:$0xff]
      %v281 = vld [vmem:[#allocation2 + $0x30] sm:$0xff]
      %v282 = vld [vmem:[#allocation2 + $0x38] sm:$0xff]
      %v283 = vld [vmem:[#allocation2 + $0x40] sm:$0xff]
      %v284 = vld [vmem:[#allocation2 + $0x48] sm:$0xff]
      %v285 = vld [vmem:[#allocation2 + $0x50] sm:$0xff]
      %v286 = vld [vmem:[#allocation2 + $0x58] sm:$0xff]
      %v287 = vld [vmem:[#allocation2 + $0x60] sm:$0xff]
      %v288 = vld [vmem:[#allocation2 + $0x68] sm:$0xff]
      %v289 = vld [vmem:[#allocation2 + $0x70] sm:$0xff]
      %v290 = vld [vmem:[#allocation2 + $0x78] sm:$0xff]
      %v291 = vld [vmem:[#allocation2 + $0x80] sm:$0xff]
      %v292 = vld [vmem:[#allocation2 + $0x88] sm:$0xff]
      %v293 = vld [vmem:[#allocation2 + $0x90] sm:$0xff]
      %v294 = vld [vmem:[#allocation2 + $0x98] sm:$0xff]
      %v295 = vld [vmem:[#allocation2 + $0xa0] sm:$0xff]
      %v296 = vld [vmem:[#allocation2 + $0xa8] sm:$0xff]
      %v297 = vld [vmem:[#allocation2 + $0xb0] sm:$0xff]
      %v298 = vld [vmem:[#allocation2 + $0xb8] sm:$0xff]
      %v299 = vld [vmem:[#allocation2 + $0xc0] sm:$0xff]
      %v300 = vld [vmem:[#allocation2 + $0xc8] sm:$0xff]
      %v301 = vld [vmem:[#allocation2 + $0xd0] sm:$0xff]
      %v302 = vld [vmem:[#allocation2 + $0xd8] sm:$0xff]
      %v303 = vld [vmem:[#allocation2 + $0xe0] sm:$0xff]
      %v304 = vld [vmem:[#allocation2 + $0xe8] sm:$0xff]
      %v305 = vld [vmem:[#allocation2 + $0xf0] sm:$0xff]
      %v306 = vld [vmem:[#allocation2 + $0xf8] sm:$0xff]
      %v307 = vld [vmem:[%s219] sm:$0xff]
      %v308 = vld [vmem:[%s219 + $0x8] sm:$0xff]
      %v309 = vld [vmem:[%s219 + $0x10] sm:$0xf]
      %v310 = vld [vmem:[%s219 + $0x14] sm:$0xff]
      %v311 = vld [vmem:[%s219 + $0x1c] sm:$0xff]
      %v312 = vld [vmem:[%s219 + $0x24] sm:$0xf]
      %v313 = vld [vmem:[%s219 + $0x28] sm:$0xff]
      %v314 = vld [vmem:[%s219 + $0x30] sm:$0xff]
      %v315 = vld [vmem:[%s219 + $0x38] sm:$0xf]
      %v316 = vld [vmem:[%s219 + $0x3c] sm:$0xff]
      %v317 = vld [vmem:[%s219 + $0x44] sm:$0xff]
      %v318 = vld [vmem:[%s219 + $0x4c] sm:$0xf]
      %v319 = vld [vmem:[%s219 + $0x50] sm:$0xff]
      %v320 = vld [vmem:[%s219 + $0x58] sm:$0xff]
      %v321 = vld [vmem:[%s219 + $0x60] sm:$0xf]
      %v322 = vld [vmem:[%s219 + $0x64] sm:$0xff]
      %v323 = vld [vmem:[%s219 + $0x6c] sm:$0xff]
      %v324 = vld [vmem:[%s219 + $0x74] sm:$0xf]
      %v325 = vld [vmem:[%s219 + $0x78] sm:$0xff]
      %v326 = vld [vmem:[%s219 + $0x80] sm:$0xff]
      %v327 = vld [vmem:[%s219 + $0x88] sm:$0xf]
      %v328 = vld [vmem:[%s219 + $0x8c] sm:$0xff]
      %v329 = vld [vmem:[%s219 + $0x94] sm:$0xff]
      %v330 = vld [vmem:[%s219 + $0x9c] sm:$0xf]
      %v331 = vld [vmem:[%s219 + $0xa0] sm:$0xff]
      %v332 = vld [vmem:[%s219 + $0xa8] sm:$0xff]
      %v333 = vld [vmem:[%s219 + $0xb0] sm:$0xf]
      %v334 = vld [vmem:[%s219 + $0xb4] sm:$0xff]
      %v335 = vld [vmem:[%s219 + $0xbc] sm:$0xff]
      %v336 = vld [vmem:[%s219 + $0xc4] sm:$0xf]
      %v337 = vld [vmem:[%s219 + $0xc8] sm:$0xff]
      %v338 = vld [vmem:[%s219 + $0xd0] sm:$0xff]
      %v339 = vld [vmem:[%s219 + $0xd8] sm:$0xf]
      %v340 = vld [vmem:[%s219 + $0xdc] sm:$0xff]
      %v341 = vld [vmem:[%s219 + $0xe4] sm:$0xff]
      %v342 = vld [vmem:[%s219 + $0xec] sm:$0xf]
      %v343 = vld [vmem:[%s219 + $0xf0] sm:$0xff]
      %v344 = vld [vmem:[%s219 + $0xf8] sm:$0xff]
      %v345 = vld [vmem:[%s219 + $0x100] sm:$0xf]
      %v346 = vld [vmem:[%s219 + $0x104] sm:$0xff]
      %v347 = vld [vmem:[%s219 + $0x10c] sm:$0xff]
      %v348 = vld [vmem:[%s219 + $0x114] sm:$0xf]
      %v349 = vld [vmem:[%s219 + $0x118] sm:$0xff]
      %v350 = vld [vmem:[%s219 + $0x120] sm:$0xff]
      %v351 = vld [vmem:[%s219 + $0x128] sm:$0xf]
      %v352 = vld [vmem:[%s219 + $0x12c] sm:$0xff]
      %v353 = vld [vmem:[%s219 + $0x134] sm:$0xff]
      %v354 = vld [vmem:[%s219 + $0x13c] sm:$0xf]
      %v355 = vld [vmem:[%s219 + $0x140] sm:$0xff]
      %v356 = vld [vmem:[%s219 + $0x148] sm:$0xff]
      %v357 = vld [vmem:[%s219 + $0x150] sm:$0xf]
      %v358 = vld [vmem:[%s219 + $0x154] sm:$0xff]
      %v359 = vld [vmem:[%s219 + $0x15c] sm:$0xff]
      %v360 = vld [vmem:[%s219 + $0x164] sm:$0xf]
      %v361 = vld [vmem:[%s219 + $0x168] sm:$0xff]
      %v362 = vld [vmem:[%s219 + $0x170] sm:$0xff]
      %v363 = vld [vmem:[%s219 + $0x178] sm:$0xf]
      %v364 = vld [vmem:[%s219 + $0x17c] sm:$0xff]
      %v365 = vld [vmem:[%s219 + $0x184] sm:$0xff]
      %v366 = vld [vmem:[%s219 + $0x18c] sm:$0xf]
      %v367 = vld [vmem:[%s219 + $0x190] sm:$0xff]
      %v368 = vld [vmem:[%s219 + $0x198] sm:$0xff]
      %v369 = vld [vmem:[%s219 + $0x1a0] sm:$0xf]
      %v370 = vld [vmem:[%s219 + $0x1a4] sm:$0xff]
      %v371 = vld [vmem:[%s219 + $0x1ac] sm:$0xff]
      %v372 = vld [vmem:[%s219 + $0x1b4] sm:$0xf]
      %v373 = vld [vmem:[%s219 + $0x1b8] sm:$0xff]
      %v374 = vld [vmem:[%s219 + $0x1c0] sm:$0xff]
      %v375 = vld [vmem:[%s219 + $0x1c8] sm:$0xf]
      %v376 = vld [vmem:[%s219 + $0x1cc] sm:$0xff]
      %v377 = vld [vmem:[%s219 + $0x1d4] sm:$0xff]
      %v378 = vld [vmem:[%s219 + $0x1dc] sm:$0xf]
      %v379 = vld [vmem:[%s219 + $0x1e0] sm:$0xff]
      %v380 = vld [vmem:[%s219 + $0x1e8] sm:$0xff]
      %v381 = vld [vmem:[%s219 + $0x1f0] sm:$0xf]
      %v382 = vld [vmem:[%s219 + $0x1f4] sm:$0xff]
      %v383 = vld [vmem:[%s219 + $0x1fc] sm:$0xff]
      %v384 = vld [vmem:[%s219 + $0x204] sm:$0xf]
      %v385 = vld [vmem:[%s219 + $0x208] sm:$0xff]
      %v386 = vld [vmem:[%s219 + $0x210] sm:$0xff]
      %v387 = vld [vmem:[%s219 + $0x218] sm:$0xf]
      %v388 = vld [vmem:[%s219 + $0x21c] sm:$0xff]
      %v389 = vld [vmem:[%s219 + $0x224] sm:$0xff]
      %v390 = vld [vmem:[%s219 + $0x22c] sm:$0xf]
      %v391 = vld [vmem:[%s219 + $0x230] sm:$0xff]
      %v392 = vld [vmem:[%s219 + $0x238] sm:$0xff]
      %v393 = vld [vmem:[%s219 + $0x240] sm:$0xf]
      %v394 = vld [vmem:[%s219 + $0x244] sm:$0xff]
      %v395 = vld [vmem:[%s219 + $0x24c] sm:$0xff]
      %v396 = vld [vmem:[%s219 + $0x254] sm:$0xf]
      %v397 = vld [vmem:[%s219 + $0x258] sm:$0xff]
      %v398 = vld [vmem:[%s219 + $0x260] sm:$0xff]
      %v399 = vld [vmem:[%s219 + $0x268] sm:$0xf]
      %v400 = vld [vmem:[%s219 + $0x26c] sm:$0xff]
      %v401 = vld [vmem:[%s219 + $0x274] sm:$0xff]
      %v402 = vld [vmem:[%s219 + $0x27c] sm:$0xf]
      %v403 = vld [vmem:[%s226] sm:$0xf]
      %v404 = vld [vmem:[%s226 + $0x4] sm:$0xf]
      %v405 = vld [vmem:[%s226 + $0x8] sm:$0xf]
      %v406 = vld [vmem:[%s226 + $0xc] sm:$0xf]
      %v407 = vld [vmem:[%s226 + $0x10] sm:$0xf]
      %v408 = vld [vmem:[%s226 + $0x14] sm:$0xf]
      %v409 = vld [vmem:[%s226 + $0x18] sm:$0xf]
      %v410 = vld [vmem:[%s226 + $0x1c] sm:$0xf]
      %v411 = vld [vmem:[%s226 + $0x20] sm:$0xf]
      %v412 = vld [vmem:[%s226 + $0x24] sm:$0xf]
      %v413 = vld [vmem:[%s226 + $0x28] sm:$0xf]
      %v414 = vld [vmem:[%s226 + $0x2c] sm:$0xf]
      %v415 = vld [vmem:[%s226 + $0x30] sm:$0xf]
      %v416 = vld [vmem:[%s226 + $0x34] sm:$0xf]
      %v417 = vld [vmem:[%s226 + $0x38] sm:$0xf]
      %v418 = vld [vmem:[%s226 + $0x3c] sm:$0xf]
      %v419 = vld [vmem:[%s226 + $0x40] sm:$0xf]
      %v420 = vld [vmem:[%s226 + $0x44] sm:$0xf]
      %v421 = vld [vmem:[%s226 + $0x48] sm:$0xf]
      %v422 = vld [vmem:[%s226 + $0x4c] sm:$0xf]
      %v423 = vld [vmem:[%s226 + $0x50] sm:$0xf]
      %v424 = vld [vmem:[%s226 + $0x54] sm:$0xf]
      %v425 = vld [vmem:[%s226 + $0x58] sm:$0xf]
      %v426 = vld [vmem:[%s226 + $0x5c] sm:$0xf]
      %v427 = vld [vmem:[%s226 + $0x60] sm:$0xf]
      %v428 = vld [vmem:[%s226 + $0x64] sm:$0xf]
      %v429 = vld [vmem:[%s226 + $0x68] sm:$0xf]
      %v430 = vld [vmem:[%s226 + $0x6c] sm:$0xf]
      %v431 = vld [vmem:[%s226 + $0x70] sm:$0xf]
      %v432 = vld [vmem:[%s226 + $0x74] sm:$0xf]
      %v433 = vld [vmem:[%s226 + $0x78] sm:$0xf]
      %v434 = vld [vmem:[%s226 + $0x7c] sm:$0xf]
      %v435 = vld [vmem:[%s226 + $0x80] sm:$0xf]
      %v436 = vld [vmem:[%s226 + $0x84] sm:$0xf]
      %v437 = vld [vmem:[%s226 + $0x88] sm:$0xf]
      %v438 = vld [vmem:[%s226 + $0x8c] sm:$0xf]
      %v439 = vld [vmem:[%s226 + $0x90] sm:$0xf]
      %v440 = vld [vmem:[%s226 + $0x94] sm:$0xf]
      %v441 = vld [vmem:[%s226 + $0x98] sm:$0xf]
      %v442 = vld [vmem:[%s226 + $0x9c] sm:$0xf]
      %v443 = vld [vmem:[%s226 + $0xa0] sm:$0xf]
      %v444 = vld [vmem:[%s226 + $0xa4] sm:$0xf]
      %v445 = vld [vmem:[%s226 + $0xa8] sm:$0xf]
      %v446 = vld [vmem:[%s226 + $0xac] sm:$0xf]
      %v447 = vld [vmem:[%s226 + $0xb0] sm:$0xf]
      %v448 = vld [vmem:[%s226 + $0xb4] sm:$0xf]
      %v449 = vld [vmem:[%s226 + $0xb8] sm:$0xf]
      %v450 = vld [vmem:[%s226 + $0xbc] sm:$0xf]
      %v451 = vld [vmem:[%s226 + $0xc0] sm:$0xf]
      %v452 = vld [vmem:[%s226 + $0xc4] sm:$0xf]
      %v453 = vld [vmem:[%s226 + $0xc8] sm:$0xf]
      %v454 = vld [vmem:[%s226 + $0xcc] sm:$0xf]
      %v455 = vld [vmem:[%s226 + $0xd0] sm:$0xf]
      %v456 = vld [vmem:[%s226 + $0xd4] sm:$0xf]
      %v457 = vld [vmem:[%s226 + $0xd8] sm:$0xf]
      %v458 = vld [vmem:[%s226 + $0xdc] sm:$0xf]
      %v459 = vld [vmem:[%s226 + $0xe0] sm:$0xf]
      %v460 = vld [vmem:[%s226 + $0xe4] sm:$0xf]
      %v461 = vld [vmem:[%s226 + $0xe8] sm:$0xf]
      %v462 = vld [vmem:[%s226 + $0xec] sm:$0xf]
      %v463 = vld [vmem:[%s226 + $0xf0] sm:$0xf]
      %v464 = vld [vmem:[%s226 + $0xf4] sm:$0xf]
      %v465 = vld [vmem:[%s226 + $0xf8] sm:$0xf]
      %v466 = vld [vmem:[%s226 + $0xfc] sm:$0xf]
      %v467 = vld [vmem:[%s226 + $0x100] sm:$0xf]
      %v468 = vld [vmem:[%s226 + $0x104] sm:$0xf]
      %v469 = vld [vmem:[%s226 + $0x108] sm:$0xf]
      %v470 = vld [vmem:[%s226 + $0x10c] sm:$0xf]
      %v471 = vld [vmem:[%s226 + $0x110] sm:$0xf]
      %v472 = vld [vmem:[%s226 + $0x114] sm:$0xf]
      %v473 = vld [vmem:[%s226 + $0x118] sm:$0xf]
      %v474 = vld [vmem:[%s226 + $0x11c] sm:$0xf]
      %v475 = vld [vmem:[%s226 + $0x120] sm:$0xf]
      %v476 = vld [vmem:[%s226 + $0x124] sm:$0xf]
      %v477 = vld [vmem:[%s226 + $0x128] sm:$0xf]
      %v478 = vld [vmem:[%s226 + $0x12c] sm:$0xf]
      %v479 = vld [vmem:[%s226 + $0x130] sm:$0xf]
      %v480 = vld [vmem:[%s226 + $0x134] sm:$0xf]
      %v481 = vld [vmem:[%s226 + $0x138] sm:$0xf]
      %v482 = vld [vmem:[%s226 + $0x13c] sm:$0xf]
      %v579 = vunpack.c.l.b16 %v307
      %v580 = vunpack.c.h.b16 %v307
      %v581 = vunpack.c.l.b16 %v308
      %v582 = vunpack.c.h.b16 %v308
      %v583 = vunpack.c.l.b16 %v309
      %v584 = vunpack.c.l.b16 %v310
      %v585 = vunpack.c.h.b16 %v310
      %v586 = vunpack.c.l.b16 %v311
      %v587 = vunpack.c.h.b16 %v311
      %v588 = vunpack.c.l.b16 %v312
      %v589 = vunpack.c.l.b16 %v313
      %v590 = vunpack.c.h.b16 %v313
      %v591 = vunpack.c.l.b16 %v314
      %v592 = vunpack.c.h.b16 %v314
      %v593 = vunpack.c.l.b16 %v315
      %v594 = vunpack.c.l.b16 %v316
      %v595 = vunpack.c.h.b16 %v316
      %v596 = vunpack.c.l.b16 %v317
      %v597 = vunpack.c.h.b16 %v317
      %v598 = vunpack.c.l.b16 %v318
      %v599 = vunpack.c.l.b16 %v319
      %v600 = vunpack.c.h.b16 %v319
      %v601 = vunpack.c.l.b16 %v320
      %v602 = vunpack.c.h.b16 %v320
      %v603 = vunpack.c.l.b16 %v321
      %v604 = vunpack.c.l.b16 %v322
      %v605 = vunpack.c.h.b16 %v322
      %v606 = vunpack.c.l.b16 %v323
      %v607 = vunpack.c.h.b16 %v323
      %v608 = vunpack.c.l.b16 %v324
      %v609 = vunpack.c.l.b16 %v325
      %v610 = vunpack.c.h.b16 %v325
      %v611 = vunpack.c.l.b16 %v326
      %v612 = vunpack.c.h.b16 %v326
      %v613 = vunpack.c.l.b16 %v327
      %v614 = vunpack.c.l.b16 %v328
      %v615 = vunpack.c.h.b16 %v328
      %v616 = vunpack.c.l.b16 %v329
      %v617 = vunpack.c.h.b16 %v329
      %v618 = vunpack.c.l.b16 %v330
      %v619 = vunpack.c.l.b16 %v331
      %v620 = vunpack.c.h.b16 %v331
      %v621 = vunpack.c.l.b16 %v332
      %v622 = vunpack.c.h.b16 %v332
      %v623 = vunpack.c.l.b16 %v333
      %v624 = vunpack.c.l.b16 %v334
      %v625 = vunpack.c.h.b16 %v334
      %v626 = vunpack.c.l.b16 %v335
      %v627 = vunpack.c.h.b16 %v335
      %v628 = vunpack.c.l.b16 %v336
      %v629 = vunpack.c.l.b16 %v337
      %v630 = vunpack.c.h.b16 %v337
      %v631 = vunpack.c.l.b16 %v338
      %v632 = vunpack.c.h.b16 %v338
      %v633 = vunpack.c.l.b16 %v339
      %v634 = vunpack.c.l.b16 %v340
      %v635 = vunpack.c.h.b16 %v340
      %v636 = vunpack.c.l.b16 %v341
      %v637 = vunpack.c.h.b16 %v341
      %v638 = vunpack.c.l.b16 %v342
      %v639 = vunpack.c.l.b16 %v343
      %v640 = vunpack.c.h.b16 %v343
      %v641 = vunpack.c.l.b16 %v344
      %v642 = vunpack.c.h.b16 %v344
      %v643 = vunpack.c.l.b16 %v345
      %v644 = vunpack.c.l.b16 %v346
      %v645 = vunpack.c.h.b16 %v346
      %v646 = vunpack.c.l.b16 %v347
      %v647 = vunpack.c.h.b16 %v347
      %v648 = vunpack.c.l.b16 %v348
      %v649 = vunpack.c.l.b16 %v349
      %v650 = vunpack.c.h.b16 %v349
      %v651 = vunpack.c.l.b16 %v350
      %v652 = vunpack.c.h.b16 %v350
      %v653 = vunpack.c.l.b16 %v351
      %v654 = vunpack.c.l.b16 %v352
      %v655 = vunpack.c.h.b16 %v352
      %v656 = vunpack.c.l.b16 %v353
      %v657 = vunpack.c.h.b16 %v353
      %v658 = vunpack.c.l.b16 %v354
      %v659 = vunpack.c.l.b16 %v355
      %v660 = vunpack.c.h.b16 %v355
      %v661 = vunpack.c.l.b16 %v356
      %v662 = vunpack.c.h.b16 %v356
      %v663 = vunpack.c.l.b16 %v357
      %v664 = vunpack.c.l.b16 %v358
      %v665 = vunpack.c.h.b16 %v358
      %v666 = vunpack.c.l.b16 %v359
      %v667 = vunpack.c.h.b16 %v359
      %v668 = vunpack.c.l.b16 %v360
      %v669 = vunpack.c.l.b16 %v361
      %v670 = vunpack.c.h.b16 %v361
      %v671 = vunpack.c.l.b16 %v362
      %v672 = vunpack.c.h.b16 %v362
      %v673 = vunpack.c.l.b16 %v363
      %v674 = vunpack.c.l.b16 %v364
      %v675 = vunpack.c.h.b16 %v364
      %v676 = vunpack.c.l.b16 %v365
      %v677 = vunpack.c.h.b16 %v365
      %v678 = vunpack.c.l.b16 %v366
      %v679 = vunpack.c.l.b16 %v367
      %v680 = vunpack.c.h.b16 %v367
      %v681 = vunpack.c.l.b16 %v368
      %v682 = vunpack.c.h.b16 %v368
      %v683 = vunpack.c.l.b16 %v369
      %v684 = vunpack.c.l.b16 %v370
      %v685 = vunpack.c.h.b16 %v370
      %v686 = vunpack.c.l.b16 %v371
      %v687 = vunpack.c.h.b16 %v371
      %v688 = vunpack.c.l.b16 %v372
      %v689 = vunpack.c.l.b16 %v373
      %v690 = vunpack.c.h.b16 %v373
      %v691 = vunpack.c.l.b16 %v374
      %v692 = vunpack.c.h.b16 %v374
      %v693 = vunpack.c.l.b16 %v375
      %v694 = vunpack.c.l.b16 %v376
      %v695 = vunpack.c.h.b16 %v376
      %v696 = vunpack.c.l.b16 %v377
      %v697 = vunpack.c.h.b16 %v377
      %v698 = vunpack.c.l.b16 %v378
      %v699 = vunpack.c.l.b16 %v379
      %v700 = vunpack.c.h.b16 %v379
      %v701 = vunpack.c.l.b16 %v380
      %v702 = vunpack.c.h.b16 %v380
      %v703 = vunpack.c.l.b16 %v381
      %v704 = vunpack.c.l.b16 %v382
      %v705 = vunpack.c.h.b16 %v382
      %v706 = vunpack.c.l.b16 %v383
      %v707 = vunpack.c.h.b16 %v383
      %v708 = vunpack.c.l.b16 %v384
      %v709 = vunpack.c.l.b16 %v385
      %v710 = vunpack.c.h.b16 %v385
      %v711 = vunpack.c.l.b16 %v386
      %v712 = vunpack.c.h.b16 %v386
      %v713 = vunpack.c.l.b16 %v387
      %v714 = vunpack.c.l.b16 %v388
      %v715 = vunpack.c.h.b16 %v388
      %v716 = vunpack.c.l.b16 %v389
      %v717 = vunpack.c.h.b16 %v389
      %v718 = vunpack.c.l.b16 %v390
      %v719 = vunpack.c.l.b16 %v391
      %v720 = vunpack.c.h.b16 %v391
      %v721 = vunpack.c.l.b16 %v392
      %v722 = vunpack.c.h.b16 %v392
      %v723 = vunpack.c.l.b16 %v393
      %v724 = vunpack.c.l.b16 %v394
      %v725 = vunpack.c.h.b16 %v394
      %v726 = vunpack.c.l.b16 %v395
      %v727 = vunpack.c.h.b16 %v395
      %v728 = vunpack.c.l.b16 %v396
      %v729 = vunpack.c.l.b16 %v397
      %v730 = vunpack.c.h.b16 %v397
      %v731 = vunpack.c.l.b16 %v398
      %v732 = vunpack.c.h.b16 %v398
      %v733 = vunpack.c.l.b16 %v399
      %v734 = vunpack.c.l.b16 %v400
      %v735 = vunpack.c.h.b16 %v400
      %v736 = vunpack.c.l.b16 %v401
      %v737 = vunpack.c.h.b16 %v401
      %v738 = vunpack.c.l.b16 %v402
      %v739 = vpack.c.b16 %v584, %v579
      %v740 = vpack.c.b16 %v585, %v580
      %v741 = vpack.c.b16 %v586, %v581
      %v742 = vpack.c.b16 %v587, %v582
      %v743 = vpack.c.b16 %v588, %v583
      %v744 = vpack.c.b16 %v594, %v589
      %v745 = vpack.c.b16 %v595, %v590
      %v746 = vpack.c.b16 %v596, %v591
      %v747 = vpack.c.b16 %v597, %v592
      %v748 = vpack.c.b16 %v598, %v593
      %v749 = vpack.c.b16 %v604, %v599
      %v750 = vpack.c.b16 %v605, %v600
      %v751 = vpack.c.b16 %v606, %v601
      %v752 = vpack.c.b16 %v607, %v602
      %v753 = vpack.c.b16 %v608, %v603
      %v754 = vpack.c.b16 %v614, %v609
      %v755 = vpack.c.b16 %v615, %v610
      %v756 = vpack.c.b16 %v616, %v611
      %v757 = vpack.c.b16 %v617, %v612
      %v758 = vpack.c.b16 %v618, %v613
      %v759 = vpack.c.b16 %v624, %v619
      %v760 = vpack.c.b16 %v625, %v620
      %v761 = vpack.c.b16 %v626, %v621
      %v762 = vpack.c.b16 %v627, %v622
      %v763 = vpack.c.b16 %v628, %v623
      %v764 = vpack.c.b16 %v634, %v629
      %v765 = vpack.c.b16 %v635, %v630
      %v766 = vpack.c.b16 %v636, %v631
      %v767 = vpack.c.b16 %v637, %v632
      %v768 = vpack.c.b16 %v638, %v633
      %v769 = vpack.c.b16 %v644, %v639
      %v770 = vpack.c.b16 %v645, %v640
      %v771 = vpack.c.b16 %v646, %v641
      %v772 = vpack.c.b16 %v647, %v642
      %v773 = vpack.c.b16 %v648, %v643
      %v774 = vpack.c.b16 %v654, %v649
      %v775 = vpack.c.b16 %v655, %v650
      %v776 = vpack.c.b16 %v656, %v651
      %v777 = vpack.c.b16 %v657, %v652
      %v778 = vpack.c.b16 %v658, %v653
      %v779 = vpack.c.b16 %v664, %v659
      %v780 = vpack.c.b16 %v665, %v660
      %v781 = vpack.c.b16 %v666, %v661
      %v782 = vpack.c.b16 %v667, %v662
      %v783 = vpack.c.b16 %v668, %v663
      %v784 = vpack.c.b16 %v674, %v669
      %v785 = vpack.c.b16 %v675, %v670
      %v786 = vpack.c.b16 %v676, %v671
      %v787 = vpack.c.b16 %v677, %v672
      %v788 = vpack.c.b16 %v678, %v673
      %v789 = vpack.c.b16 %v684, %v679
      %v790 = vpack.c.b16 %v685, %v680
      %v791 = vpack.c.b16 %v686, %v681
      %v792 = vpack.c.b16 %v687, %v682
      %v793 = vpack.c.b16 %v688, %v683
      %v794 = vpack.c.b16 %v694, %v689
      %v795 = vpack.c.b16 %v695, %v690
      %v796 = vpack.c.b16 %v696, %v691
      %v797 = vpack.c.b16 %v697, %v692
      %v798 = vpack.c.b16 %v698, %v693
      %v799 = vpack.c.b16 %v704, %v699
      %v800 = vpack.c.b16 %v705, %v700
      %v801 = vpack.c.b16 %v706, %v701
      %v802 = vpack.c.b16 %v707, %v702
      %v803 = vpack.c.b16 %v708, %v703
      %v804 = vpack.c.b16 %v714, %v709
      %v805 = vpack.c.b16 %v715, %v710
      %v806 = vpack.c.b16 %v716, %v711
      %v807 = vpack.c.b16 %v717, %v712
      %v808 = vpack.c.b16 %v718, %v713
      %v809 = vpack.c.b16 %v724, %v719
      %v810 = vpack.c.b16 %v725, %v720
      %v811 = vpack.c.b16 %v726, %v721
      %v812 = vpack.c.b16 %v727, %v722
      %v813 = vpack.c.b16 %v728, %v723
      %v814 = vpack.c.b16 %v734, %v729
      %v815 = vpack.c.b16 %v735, %v730
      %v816 = vpack.c.b16 %v736, %v731
      %v817 = vpack.c.b16 %v737, %v732
      %v818 = vpack.c.b16 %v738, %v733
      %v979 = vunpack.c.l.b16 %v403
      %v980 = vunpack.c.l.b16 %v404
      %v981 = vunpack.c.l.b16 %v405
      %v982 = vunpack.c.l.b16 %v406
      %v983 = vunpack.c.l.b16 %v407
      %v984 = vunpack.c.l.b16 %v408
      %v985 = vunpack.c.l.b16 %v409
      %v986 = vunpack.c.l.b16 %v410
      %v987 = vunpack.c.l.b16 %v411
      %v988 = vunpack.c.l.b16 %v412
      %v989 = vunpack.c.l.b16 %v413
      %v990 = vunpack.c.l.b16 %v414
      %v991 = vunpack.c.l.b16 %v415
      %v992 = vunpack.c.l.b16 %v416
      %v993 = vunpack.c.l.b16 %v417
      %v994 = vunpack.c.l.b16 %v418
      %v995 = vunpack.c.l.b16 %v419
      %v996 = vunpack.c.l.b16 %v420
      %v997 = vunpack.c.l.b16 %v421
      %v998 = vunpack.c.l.b16 %v422
      %v999 = vunpack.c.l.b16 %v423
      %v1000 = vunpack.c.l.b16 %v424
      %v1001 = vunpack.c.l.b16 %v425
      %v1002 = vunpack.c.l.b16 %v426
      %v1003 = vunpack.c.l.b16 %v427
      %v1004 = vunpack.c.l.b16 %v428
      %v1005 = vunpack.c.l.b16 %v429
      %v1006 = vunpack.c.l.b16 %v430
      %v1007 = vunpack.c.l.b16 %v431
      %v1008 = vunpack.c.l.b16 %v432
      %v1009 = vunpack.c.l.b16 %v433
      %v1010 = vunpack.c.l.b16 %v434
      %v1011 = vunpack.c.l.b16 %v435
      %v1012 = vunpack.c.l.b16 %v436
      %v1013 = vunpack.c.l.b16 %v437
      %v1014 = vunpack.c.l.b16 %v438
      %v1015 = vunpack.c.l.b16 %v439
      %v1016 = vunpack.c.l.b16 %v440
      %v1017 = vunpack.c.l.b16 %v441
      %v1018 = vunpack.c.l.b16 %v442
      %v1019 = vunpack.c.l.b16 %v443
      %v1020 = vunpack.c.l.b16 %v444
      %v1021 = vunpack.c.l.b16 %v445
      %v1022 = vunpack.c.l.b16 %v446
      %v1023 = vunpack.c.l.b16 %v447
      %v1024 = vunpack.c.l.b16 %v448
      %v1025 = vunpack.c.l.b16 %v449
      %v1026 = vunpack.c.l.b16 %v450
      %v1027 = vunpack.c.l.b16 %v451
      %v1028 = vunpack.c.l.b16 %v452
      %v1029 = vunpack.c.l.b16 %v453
      %v1030 = vunpack.c.l.b16 %v454
      %v1031 = vunpack.c.l.b16 %v455
      %v1032 = vunpack.c.l.b16 %v456
      %v1033 = vunpack.c.l.b16 %v457
      %v1034 = vunpack.c.l.b16 %v458
      %v1035 = vunpack.c.l.b16 %v459
      %v1036 = vunpack.c.l.b16 %v460
      %v1037 = vunpack.c.l.b16 %v461
      %v1038 = vunpack.c.l.b16 %v462
      %v1039 = vunpack.c.l.b16 %v463
      %v1040 = vunpack.c.l.b16 %v464
      %v1041 = vunpack.c.l.b16 %v465
      %v1042 = vunpack.c.l.b16 %v466
      %v1043 = vunpack.c.l.b16 %v467
      %v1044 = vunpack.c.l.b16 %v468
      %v1045 = vunpack.c.l.b16 %v469
      %v1046 = vunpack.c.l.b16 %v470
      %v1047 = vunpack.c.l.b16 %v471
      %v1048 = vunpack.c.l.b16 %v472
      %v1049 = vunpack.c.l.b16 %v473
      %v1050 = vunpack.c.l.b16 %v474
      %v1051 = vunpack.c.l.b16 %v475
      %v1052 = vunpack.c.l.b16 %v476
      %v1053 = vunpack.c.l.b16 %v477
      %v1054 = vunpack.c.l.b16 %v478
      %v1055 = vunpack.c.l.b16 %v479
      %v1056 = vunpack.c.l.b16 %v480
      %v1057 = vunpack.c.l.b16 %v481
      %v1058 = vunpack.c.l.b16 %v482
      %v1059 = vpack.c.b16 %v980, %v979
      %v1060 = vpack.c.b16 %v982, %v981
      %v1061 = vpack.c.b16 %v984, %v983
      %v1062 = vpack.c.b16 %v986, %v985
      %v1063 = vpack.c.b16 %v988, %v987
      %v1064 = vpack.c.b16 %v990, %v989
      %v1065 = vpack.c.b16 %v992, %v991
      %v1066 = vpack.c.b16 %v994, %v993
      %v1067 = vpack.c.b16 %v996, %v995
      %v1068 = vpack.c.b16 %v998, %v997
      %v1069 = vpack.c.b16 %v1000, %v999
      %v1070 = vpack.c.b16 %v1002, %v1001
      %v1071 = vpack.c.b16 %v1004, %v1003
      %v1072 = vpack.c.b16 %v1006, %v1005
      %v1073 = vpack.c.b16 %v1008, %v1007
      %v1074 = vpack.c.b16 %v1010, %v1009
      %v1075 = vpack.c.b16 %v1012, %v1011
      %v1076 = vpack.c.b16 %v1014, %v1013
      %v1077 = vpack.c.b16 %v1016, %v1015
      %v1078 = vpack.c.b16 %v1018, %v1017
      %v1079 = vpack.c.b16 %v1020, %v1019
      %v1080 = vpack.c.b16 %v1022, %v1021
      %v1081 = vpack.c.b16 %v1024, %v1023
      %v1082 = vpack.c.b16 %v1026, %v1025
      %v1083 = vpack.c.b16 %v1028, %v1027
      %v1084 = vpack.c.b16 %v1030, %v1029
      %v1085 = vpack.c.b16 %v1032, %v1031
      %v1086 = vpack.c.b16 %v1034, %v1033
      %v1087 = vpack.c.b16 %v1036, %v1035
      %v1088 = vpack.c.b16 %v1038, %v1037
      %v1089 = vpack.c.b16 %v1040, %v1039
      %v1090 = vpack.c.b16 %v1042, %v1041
      %v1091 = vpack.c.b16 %v1044, %v1043
      %v1092 = vpack.c.b16 %v1046, %v1045
      %v1093 = vpack.c.b16 %v1048, %v1047
      %v1094 = vpack.c.b16 %v1050, %v1049
      %v1095 = vpack.c.b16 %v1052, %v1051
      %v1096 = vpack.c.b16 %v1054, %v1053
      %v1097 = vpack.c.b16 %v1056, %v1055
      %v1098 = vpack.c.b16 %v1058, %v1057
      %1139 = vmatpush.bf16.msra.mxu0 %v1066
      %1140 = vmatpush.bf16.msra.mxu0 %v1065
      %1141 = vmatpush.bf16.msra.mxu0 %v1064
      %1142 = vmatpush.bf16.msra.mxu0 %v1063
      %1143 = vmatpush.bf16.msra.mxu0 %v1062
      %1144 = vmatpush.bf16.msra.mxu0 %v1061
      %1145 = vmatpush.bf16.msra.mxu0 %v1060
      %1146 = vmatpush.bf16.msra.mxu0 %v1059
      %1147 = vmatmul.bf16.gmra.mxu0 %v739
      %v1148 = vpop.f32.mrf.mxu0
      %v1149 = vadd.f32 0.0, %v1148
      %v1150 = vpop.f32.mrf.mxu0
      %v1151 = vadd.f32 0.0, %v1150
      %1152 = vmatmul.bf16.gmra.mxu0 %v744
      %v1153 = vpop.f32.mrf.mxu0
      %v1154 = vadd.f32 0.0, %v1153
      %v1155 = vpop.f32.mrf.mxu0
      %v1156 = vadd.f32 0.0, %v1155
      %1157 = vmatmul.bf16.gmra.mxu0 %v749
      %v1158 = vpop.f32.mrf.mxu0
      %v1159 = vadd.f32 0.0, %v1158
      %v1160 = vpop.f32.mrf.mxu0
      %v1161 = vadd.f32 0.0, %v1160
      %1162 = vmatmul.bf16.gmra.mxu0 %v754
      %v1163 = vpop.f32.mrf.mxu0
      %v1164 = vadd.f32 0.0, %v1163
      %v1165 = vpop.f32.mrf.mxu0
      %v1166 = vadd.f32 0.0, %v1165
      %1167 = vmatmul.bf16.gmra.mxu0 %v759
      %v1168 = vpop.f32.mrf.mxu0
      %v1169 = vadd.f32 0.0, %v1168
      %v1170 = vpop.f32.mrf.mxu0
      %v1171 = vadd.f32 0.0, %v1170
      %1172 = vmatmul.bf16.gmra.mxu0 %v764
      %v1173 = vpop.f32.mrf.mxu0
      %v1174 = vadd.f32 0.0, %v1173
      %v1175 = vpop.f32.mrf.mxu0
      %v1176 = vadd.f32 0.0, %v1175
      %1177 = vmatmul.bf16.gmra.mxu0 %v769
      %v1178 = vpop.f32.mrf.mxu0
      %v1179 = vadd.f32 0.0, %v1178
      %v1180 = vpop.f32.mrf.mxu0
      %v1181 = vadd.f32 0.0, %v1180
      %1182 = vmatmul.bf16.gmra.mxu0 %v774
      %v1183 = vpop.f32.mrf.mxu0
      %v1184 = vadd.f32 0.0, %v1183
      %v1185 = vpop.f32.mrf.mxu0
      %v1186 = vadd.f32 0.0, %v1185
      %1187 = vmatmul.bf16.gmra.mxu0 %v779
      %v1188 = vpop.f32.mrf.mxu0
      %v1189 = vadd.f32 0.0, %v1188
      %v1190 = vpop.f32.mrf.mxu0
      %v1191 = vadd.f32 0.0, %v1190
      %1192 = vmatmul.bf16.gmra.mxu0 %v784
      %v1193 = vpop.f32.mrf.mxu0
      %v1194 = vadd.f32 0.0, %v1193
      %v1195 = vpop.f32.mrf.mxu0
      %v1196 = vadd.f32 0.0, %v1195
      %1197 = vmatmul.bf16.gmra.mxu0 %v789
      %v1198 = vpop.f32.mrf.mxu0
      %v1199 = vadd.f32 0.0, %v1198
      %v1200 = vpop.f32.mrf.mxu0
      %v1201 = vadd.f32 0.0, %v1200
      %1202 = vmatmul.bf16.gmra.mxu0 %v794
      %v1203 = vpop.f32.mrf.mxu0
      %v1204 = vadd.f32 0.0, %v1203
      %v1205 = vpop.f32.mrf.mxu0
      %v1206 = vadd.f32 0.0, %v1205
      %1207 = vmatmul.bf16.gmra.mxu0 %v799
      %v1208 = vpop.f32.mrf.mxu0
      %v1209 = vadd.f32 0.0, %v1208
      %v1210 = vpop.f32.mrf.mxu0
      %v1211 = vadd.f32 0.0, %v1210
      %1212 = vmatmul.bf16.gmra.mxu0 %v804
      %v1213 = vpop.f32.mrf.mxu0
      %v1214 = vadd.f32 0.0, %v1213
      %v1215 = vpop.f32.mrf.mxu0
      %v1216 = vadd.f32 0.0, %v1215
      %1217 = vmatmul.bf16.gmra.mxu0 %v809
      %v1218 = vpop.f32.mrf.mxu0
      %v1219 = vadd.f32 0.0, %v1218
      %v1220 = vpop.f32.mrf.mxu0
      %v1221 = vadd.f32 0.0, %v1220
      %1222 = vmatmul.bf16.gmra.mxu0 %v814
      %v1223 = vpop.f32.mrf.mxu0
      %v1224 = vadd.f32 0.0, %v1223
      %v1225 = vpop.f32.mrf.mxu0
      %v1226 = vadd.f32 0.0, %v1225
      %1227 = vdwg.mxu0
      %1228 = vmatpush.bf16.msra.mxu0 %v1074
      %1229 = vmatpush.bf16.msra.mxu0 %v1073
      %1230 = vmatpush.bf16.msra.mxu0 %v1072
      %1231 = vmatpush.bf16.msra.mxu0 %v1071
      %1232 = vmatpush.bf16.msra.mxu0 %v1070
      %1233 = vmatpush.bf16.msra.mxu0 %v1069
      %1234 = vmatpush.bf16.msra.mxu0 %v1068
      %1235 = vmatpush.bf16.msra.mxu0 %v1067
      %1236 = vmatmul.bf16.gmra.mxu0 %v740
      %v1237 = vpop.f32.mrf.mxu0
      %v1238 = vadd.f32 %v1149, %v1237
      %v1239 = vpop.f32.mrf.mxu0
      %v1240 = vadd.f32 %v1151, %v1239
      %1241 = vmatmul.bf16.gmra.mxu0 %v745
      %v1242 = vpop.f32.mrf.mxu0
      %v1243 = vadd.f32 %v1154, %v1242
      %v1244 = vpop.f32.mrf.mxu0
      %v1245 = vadd.f32 %v1156, %v1244
      %1246 = vmatmul.bf16.gmra.mxu0 %v750
      %v1247 = vpop.f32.mrf.mxu0
      %v1248 = vadd.f32 %v1159, %v1247
      %v1249 = vpop.f32.mrf.mxu0
      %v1250 = vadd.f32 %v1161, %v1249
      %1251 = vmatmul.bf16.gmra.mxu0 %v755
      %v1252 = vpop.f32.mrf.mxu0
      %v1253 = vadd.f32 %v1164, %v1252
      %v1254 = vpop.f32.mrf.mxu0
      %v1255 = vadd.f32 %v1166, %v1254
      %1256 = vmatmul.bf16.gmra.mxu0 %v760
      %v1257 = vpop.f32.mrf.mxu0
      %v1258 = vadd.f32 %v1169, %v1257
      %v1259 = vpop.f32.mrf.mxu0
      %v1260 = vadd.f32 %v1171, %v1259
      %1261 = vmatmul.bf16.gmra.mxu0 %v765
      %v1262 = vpop.f32.mrf.mxu0
      %v1263 = vadd.f32 %v1174, %v1262
      %v1264 = vpop.f32.mrf.mxu0
      %v1265 = vadd.f32 %v1176, %v1264
      %1266 = vmatmul.bf16.gmra.mxu0 %v770
      %v1267 = vpop.f32.mrf.mxu0
      %v1268 = vadd.f32 %v1179, %v1267
      %v1269 = vpop.f32.mrf.mxu0
      %v1270 = vadd.f32 %v1181, %v1269
      %1271 = vmatmul.bf16.gmra.mxu0 %v775
      %v1272 = vpop.f32.mrf.mxu0
      %v1273 = vadd.f32 %v1184, %v1272
      %v1274 = vpop.f32.mrf.mxu0
      %v1275 = vadd.f32 %v1186, %v1274
      %1276 = vmatmul.bf16.gmra.mxu0 %v780
      %v1277 = vpop.f32.mrf.mxu0
      %v1278 = vadd.f32 %v1189, %v1277
      %v1279 = vpop.f32.mrf.mxu0
      %v1280 = vadd.f32 %v1191, %v1279
      %1281 = vmatmul.bf16.gmra.mxu0 %v785
      %v1282 = vpop.f32.mrf.mxu0
      %v1283 = vadd.f32 %v1194, %v1282
      %v1284 = vpop.f32.mrf.mxu0
      %v1285 = vadd.f32 %v1196, %v1284
      %1286 = vmatmul.bf16.gmra.mxu0 %v790
      %v1287 = vpop.f32.mrf.mxu0
      %v1288 = vadd.f32 %v1199, %v1287
      %v1289 = vpop.f32.mrf.mxu0
      %v1290 = vadd.f32 %v1201, %v1289
      %1291 = vmatmul.bf16.gmra.mxu0 %v795
      %v1292 = vpop.f32.mrf.mxu0
      %v1293 = vadd.f32 %v1204, %v1292
      %v1294 = vpop.f32.mrf.mxu0
      %v1295 = vadd.f32 %v1206, %v1294
      %1296 = vmatmul.bf16.gmra.mxu0 %v800
      %v1297 = vpop.f32.mrf.mxu0
      %v1298 = vadd.f32 %v1209, %v1297
      %v1299 = vpop.f32.mrf.mxu0
      %v1300 = vadd.f32 %v1211, %v1299
      %1301 = vmatmul.bf16.gmra.mxu0 %v805
      %v1302 = vpop.f32.mrf.mxu0
      %v1303 = vadd.f32 %v1214, %v1302
      %v1304 = vpop.f32.mrf.mxu0
      %v1305 = vadd.f32 %v1216, %v1304
      %1306 = vmatmul.bf16.gmra.mxu0 %v810
      %v1307 = vpop.f32.mrf.mxu0
      %v1308 = vadd.f32 %v1219, %v1307
      %v1309 = vpop.f32.mrf.mxu0
      %v1310 = vadd.f32 %v1221, %v1309
      %1311 = vmatmul.bf16.gmra.mxu0 %v815
      %v1312 = vpop.f32.mrf.mxu0
      %v1313 = vadd.f32 %v1224, %v1312
      %v1314 = vpop.f32.mrf.mxu0
      %v1315 = vadd.f32 %v1226, %v1314
      %1316 = vdwg.mxu0
      %1317 = vmatpush.bf16.msra.mxu0 %v1082
      %1318 = vmatpush.bf16.msra.mxu0 %v1081
      %1319 = vmatpush.bf16.msra.mxu0 %v1080
      %1320 = vmatpush.bf16.msra.mxu0 %v1079
      %1321 = vmatpush.bf16.msra.mxu0 %v1078
      %1322 = vmatpush.bf16.msra.mxu0 %v1077
      %1323 = vmatpush.bf16.msra.mxu0 %v1076
      %1324 = vmatpush.bf16.msra.mxu0 %v1075
      %1325 = vmatmul.bf16.gmra.mxu0 %v741
      %v1326 = vpop.f32.mrf.mxu0
      %v1327 = vadd.f32 %v1238, %v1326
      %v1328 = vpop.f32.mrf.mxu0
      %v1329 = vadd.f32 %v1240, %v1328
      %1330 = vmatmul.bf16.gmra.mxu0 %v746
      %v1331 = vpop.f32.mrf.mxu0
      %v1332 = vadd.f32 %v1243, %v1331
      %v1333 = vpop.f32.mrf.mxu0
      %v1334 = vadd.f32 %v1245, %v1333
      %1335 = vmatmul.bf16.gmra.mxu0 %v751
      %v1336 = vpop.f32.mrf.mxu0
      %v1337 = vadd.f32 %v1248, %v1336
      %v1338 = vpop.f32.mrf.mxu0
      %v1339 = vadd.f32 %v1250, %v1338
      %1340 = vmatmul.bf16.gmra.mxu0 %v756
      %v1341 = vpop.f32.mrf.mxu0
      %v1342 = vadd.f32 %v1253, %v1341
      %v1343 = vpop.f32.mrf.mxu0
      %v1344 = vadd.f32 %v1255, %v1343
      %1345 = vmatmul.bf16.gmra.mxu0 %v761
      %v1346 = vpop.f32.mrf.mxu0
      %v1347 = vadd.f32 %v1258, %v1346
      %v1348 = vpop.f32.mrf.mxu0
      %v1349 = vadd.f32 %v1260, %v1348
      %1350 = vmatmul.bf16.gmra.mxu0 %v766
      %v1351 = vpop.f32.mrf.mxu0
      %v1352 = vadd.f32 %v1263, %v1351
      %v1353 = vpop.f32.mrf.mxu0
      %v1354 = vadd.f32 %v1265, %v1353
      %1355 = vmatmul.bf16.gmra.mxu0 %v771
      %v1356 = vpop.f32.mrf.mxu0
      %v1357 = vadd.f32 %v1268, %v1356
      %v1358 = vpop.f32.mrf.mxu0
      %v1359 = vadd.f32 %v1270, %v1358
      %1360 = vmatmul.bf16.gmra.mxu0 %v776
      %v1361 = vpop.f32.mrf.mxu0
      %v1362 = vadd.f32 %v1273, %v1361
      %v1363 = vpop.f32.mrf.mxu0
      %v1364 = vadd.f32 %v1275, %v1363
      %1365 = vmatmul.bf16.gmra.mxu0 %v781
      %v1366 = vpop.f32.mrf.mxu0
      %v1367 = vadd.f32 %v1278, %v1366
      %v1368 = vpop.f32.mrf.mxu0
      %v1369 = vadd.f32 %v1280, %v1368
      %1370 = vmatmul.bf16.gmra.mxu0 %v786
      %v1371 = vpop.f32.mrf.mxu0
      %v1372 = vadd.f32 %v1283, %v1371
      %v1373 = vpop.f32.mrf.mxu0
      %v1374 = vadd.f32 %v1285, %v1373
      %1375 = vmatmul.bf16.gmra.mxu0 %v791
      %v1376 = vpop.f32.mrf.mxu0
      %v1377 = vadd.f32 %v1288, %v1376
      %v1378 = vpop.f32.mrf.mxu0
      %v1379 = vadd.f32 %v1290, %v1378
      %1380 = vmatmul.bf16.gmra.mxu0 %v796
      %v1381 = vpop.f32.mrf.mxu0
      %v1382 = vadd.f32 %v1293, %v1381
      %v1383 = vpop.f32.mrf.mxu0
      %v1384 = vadd.f32 %v1295, %v1383
      %1385 = vmatmul.bf16.gmra.mxu0 %v801
      %v1386 = vpop.f32.mrf.mxu0
      %v1387 = vadd.f32 %v1298, %v1386
      %v1388 = vpop.f32.mrf.mxu0
      %v1389 = vadd.f32 %v1300, %v1388
      %1390 = vmatmul.bf16.gmra.mxu0 %v806
      %v1391 = vpop.f32.mrf.mxu0
      %v1392 = vadd.f32 %v1303, %v1391
      %v1393 = vpop.f32.mrf.mxu0
      %v1394 = vadd.f32 %v1305, %v1393
      %1395 = vmatmul.bf16.gmra.mxu0 %v811
      %v1396 = vpop.f32.mrf.mxu0
      %v1397 = vadd.f32 %v1308, %v1396
      %v1398 = vpop.f32.mrf.mxu0
      %v1399 = vadd.f32 %v1310, %v1398
      %1400 = vmatmul.bf16.gmra.mxu0 %v816
      %v1401 = vpop.f32.mrf.mxu0
      %v1402 = vadd.f32 %v1313, %v1401
      %v1403 = vpop.f32.mrf.mxu0
      %v1404 = vadd.f32 %v1315, %v1403
      %1405 = vdwg.mxu0
      %1406 = vmatpush.bf16.msra.mxu0 %v1090
      %1407 = vmatpush.bf16.msra.mxu0 %v1089
      %1408 = vmatpush.bf16.msra.mxu0 %v1088
      %1409 = vmatpush.bf16.msra.mxu0 %v1087
      %1410 = vmatpush.bf16.msra.mxu0 %v1086
      %1411 = vmatpush.bf16.msra.mxu0 %v1085
      %1412 = vmatpush.bf16.msra.mxu0 %v1084
      %1413 = vmatpush.bf16.msra.mxu0 %v1083
      %1414 = vmatmul.bf16.gmra.mxu0 %v742
      %v1415 = vpop.f32.mrf.mxu0
      %v1416 = vadd.f32 %v1327, %v1415
      %v1417 = vpop.f32.mrf.mxu0
      %v1418 = vadd.f32 %v1329, %v1417
      %1419 = vmatmul.bf16.gmra.mxu0 %v747
      %v1420 = vpop.f32.mrf.mxu0
      %v1421 = vadd.f32 %v1332, %v1420
      %v1422 = vpop.f32.mrf.mxu0
      %v1423 = vadd.f32 %v1334, %v1422
      %1424 = vmatmul.bf16.gmra.mxu0 %v752
      %v1425 = vpop.f32.mrf.mxu0
      %v1426 = vadd.f32 %v1337, %v1425
      %v1427 = vpop.f32.mrf.mxu0
      %v1428 = vadd.f32 %v1339, %v1427
      %1429 = vmatmul.bf16.gmra.mxu0 %v757
      %v1430 = vpop.f32.mrf.mxu0
      %v1431 = vadd.f32 %v1342, %v1430
      %v1432 = vpop.f32.mrf.mxu0
      %v1433 = vadd.f32 %v1344, %v1432
      %1434 = vmatmul.bf16.gmra.mxu0 %v762
      %v1435 = vpop.f32.mrf.mxu0
      %v1436 = vadd.f32 %v1347, %v1435
      %v1437 = vpop.f32.mrf.mxu0
      %v1438 = vadd.f32 %v1349, %v1437
      %1439 = vmatmul.bf16.gmra.mxu0 %v767
      %v1440 = vpop.f32.mrf.mxu0
      %v1441 = vadd.f32 %v1352, %v1440
      %v1442 = vpop.f32.mrf.mxu0
      %v1443 = vadd.f32 %v1354, %v1442
      %1444 = vmatmul.bf16.gmra.mxu0 %v772
      %v1445 = vpop.f32.mrf.mxu0
      %v1446 = vadd.f32 %v1357, %v1445
      %v1447 = vpop.f32.mrf.mxu0
      %v1448 = vadd.f32 %v1359, %v1447
      %1449 = vmatmul.bf16.gmra.mxu0 %v777
      %v1450 = vpop.f32.mrf.mxu0
      %v1451 = vadd.f32 %v1362, %v1450
      %v1452 = vpop.f32.mrf.mxu0
      %v1453 = vadd.f32 %v1364, %v1452
      %1454 = vmatmul.bf16.gmra.mxu0 %v782
      %v1455 = vpop.f32.mrf.mxu0
      %v1456 = vadd.f32 %v1367, %v1455
      %v1457 = vpop.f32.mrf.mxu0
      %v1458 = vadd.f32 %v1369, %v1457
      %1459 = vmatmul.bf16.gmra.mxu0 %v787
      %v1460 = vpop.f32.mrf.mxu0
      %v1461 = vadd.f32 %v1372, %v1460
      %v1462 = vpop.f32.mrf.mxu0
      %v1463 = vadd.f32 %v1374, %v1462
      %1464 = vmatmul.bf16.gmra.mxu0 %v792
      %v1465 = vpop.f32.mrf.mxu0
      %v1466 = vadd.f32 %v1377, %v1465
      %v1467 = vpop.f32.mrf.mxu0
      %v1468 = vadd.f32 %v1379, %v1467
      %1469 = vmatmul.bf16.gmra.mxu0 %v797
      %v1470 = vpop.f32.mrf.mxu0
      %v1471 = vadd.f32 %v1382, %v1470
      %v1472 = vpop.f32.mrf.mxu0
      %v1473 = vadd.f32 %v1384, %v1472
      %1474 = vmatmul.bf16.gmra.mxu0 %v802
      %v1475 = vpop.f32.mrf.mxu0
      %v1476 = vadd.f32 %v1387, %v1475
      %v1477 = vpop.f32.mrf.mxu0
      %v1478 = vadd.f32 %v1389, %v1477
      %1479 = vmatmul.bf16.gmra.mxu0 %v807
      %v1480 = vpop.f32.mrf.mxu0
      %v1481 = vadd.f32 %v1392, %v1480
      %v1482 = vpop.f32.mrf.mxu0
      %v1483 = vadd.f32 %v1394, %v1482
      %1484 = vmatmul.bf16.gmra.mxu0 %v812
      %v1485 = vpop.f32.mrf.mxu0
      %v1486 = vadd.f32 %v1397, %v1485
      %v1487 = vpop.f32.mrf.mxu0
      %v1488 = vadd.f32 %v1399, %v1487
      %1489 = vmatmul.bf16.gmra.mxu0 %v817
      %v1490 = vpop.f32.mrf.mxu0
      %v1491 = vadd.f32 %v1402, %v1490
      %v1492 = vpop.f32.mrf.mxu0
      %v1493 = vadd.f32 %v1404, %v1492
      %1494 = vdwg.mxu0
      %1495 = vmatpush.bf16.msra.mxu0 %v1098
      %1496 = vmatpush.bf16.msra.mxu0 %v1097
      %1497 = vmatpush.bf16.msra.mxu0 %v1096
      %1498 = vmatpush.bf16.msra.mxu0 %v1095
      %1499 = vmatpush.bf16.msra.mxu0 %v1094
      %1500 = vmatpush.bf16.msra.mxu0 %v1093
      %1501 = vmatpush.bf16.msra.mxu0 %v1092
      %1502 = vmatpush.bf16.msra.mxu0 %v1091
      %1503 = vmatmul.bf16.gmra.mxu0 %v743
      %v1504 = vpop.f32.mrf.mxu0
      %v1505 = vadd.f32 %v1416, %v1504
      %v1506 = vpop.f32.mrf.mxu0
      %v1507 = vadd.f32 %v1418, %v1506
      %1508 = vmatmul.bf16.gmra.mxu0 %v748
      %v1509 = vpop.f32.mrf.mxu0
      %v1510 = vadd.f32 %v1421, %v1509
      %v1511 = vpop.f32.mrf.mxu0
      %v1512 = vadd.f32 %v1423, %v1511
      %1513 = vmatmul.bf16.gmra.mxu0 %v753
      %v1514 = vpop.f32.mrf.mxu0
      %v1515 = vadd.f32 %v1426, %v1514
      %v1516 = vpop.f32.mrf.mxu0
      %v1517 = vadd.f32 %v1428, %v1516
      %1518 = vmatmul.bf16.gmra.mxu0 %v758
      %v1519 = vpop.f32.mrf.mxu0
      %v1520 = vadd.f32 %v1431, %v1519
      %v1521 = vpop.f32.mrf.mxu0
      %v1522 = vadd.f32 %v1433, %v1521
      %1523 = vmatmul.bf16.gmra.mxu0 %v763
      %v1524 = vpop.f32.mrf.mxu0
      %v1525 = vadd.f32 %v1436, %v1524
      %v1526 = vpop.f32.mrf.mxu0
      %v1527 = vadd.f32 %v1438, %v1526
      %1528 = vmatmul.bf16.gmra.mxu0 %v768
      %v1529 = vpop.f32.mrf.mxu0
      %v1530 = vadd.f32 %v1441, %v1529
      %v1531 = vpop.f32.mrf.mxu0
      %v1532 = vadd.f32 %v1443, %v1531
      %1533 = vmatmul.bf16.gmra.mxu0 %v773
      %v1534 = vpop.f32.mrf.mxu0
      %v1535 = vadd.f32 %v1446, %v1534
      %v1536 = vpop.f32.mrf.mxu0
      %v1537 = vadd.f32 %v1448, %v1536
      %1538 = vmatmul.bf16.gmra.mxu0 %v778
      %v1539 = vpop.f32.mrf.mxu0
      %v1540 = vadd.f32 %v1451, %v1539
      %v1541 = vpop.f32.mrf.mxu0
      %v1542 = vadd.f32 %v1453, %v1541
      %1543 = vmatmul.bf16.gmra.mxu0 %v783
      %v1544 = vpop.f32.mrf.mxu0
      %v1545 = vadd.f32 %v1456, %v1544
      %v1546 = vpop.f32.mrf.mxu0
      %v1547 = vadd.f32 %v1458, %v1546
      %1548 = vmatmul.bf16.gmra.mxu0 %v788
      %v1549 = vpop.f32.mrf.mxu0
      %v1550 = vadd.f32 %v1461, %v1549
      %v1551 = vpop.f32.mrf.mxu0
      %v1552 = vadd.f32 %v1463, %v1551
      %1553 = vmatmul.bf16.gmra.mxu0 %v793
      %v1554 = vpop.f32.mrf.mxu0
      %v1555 = vadd.f32 %v1466, %v1554
      %v1556 = vpop.f32.mrf.mxu0
      %v1557 = vadd.f32 %v1468, %v1556
      %1558 = vmatmul.bf16.gmra.mxu0 %v798
      %v1559 = vpop.f32.mrf.mxu0
      %v1560 = vadd.f32 %v1471, %v1559
      %v1561 = vpop.f32.mrf.mxu0
      %v1562 = vadd.f32 %v1473, %v1561
      %1563 = vmatmul.bf16.gmra.mxu0 %v803
      %v1564 = vpop.f32.mrf.mxu0
      %v1565 = vadd.f32 %v1476, %v1564
      %v1566 = vpop.f32.mrf.mxu0
      %v1567 = vadd.f32 %v1478, %v1566
      %1568 = vmatmul.bf16.gmra.mxu0 %v808
      %v1569 = vpop.f32.mrf.mxu0
      %v1570 = vadd.f32 %v1481, %v1569
      %v1571 = vpop.f32.mrf.mxu0
      %v1572 = vadd.f32 %v1483, %v1571
      %1573 = vmatmul.bf16.gmra.mxu0 %v813
      %v1574 = vpop.f32.mrf.mxu0
      %v1575 = vadd.f32 %v1486, %v1574
      %v1576 = vpop.f32.mrf.mxu0
      %v1577 = vadd.f32 %v1488, %v1576
      %1578 = vmatmul.bf16.gmra.mxu0 %v818
      %v1579 = vpop.f32.mrf.mxu0
      %v1580 = vadd.f32 %v1491, %v1579
      %v1581 = vpop.f32.mrf.mxu0
      %v1582 = vadd.f32 %v1493, %v1581
      %1583 = vdwg.mxu0
      %v1584 = vadd.f32 %v275, %v1505
      %v1585 = vadd.f32 %v276, %v1507
      %v1586 = vadd.f32 %v277, %v1510
      %v1587 = vadd.f32 %v278, %v1512
      %v1588 = vadd.f32 %v279, %v1515
      %v1589 = vadd.f32 %v280, %v1517
      %v1590 = vadd.f32 %v281, %v1520
      %v1591 = vadd.f32 %v282, %v1522
      %v1592 = vadd.f32 %v283, %v1525
      %v1593 = vadd.f32 %v284, %v1527
      %v1594 = vadd.f32 %v285, %v1530
      %v1595 = vadd.f32 %v286, %v1532
      %v1596 = vadd.f32 %v287, %v1535
      %v1597 = vadd.f32 %v288, %v1537
      %v1598 = vadd.f32 %v289, %v1540
      %v1599 = vadd.f32 %v290, %v1542
      %v1600 = vadd.f32 %v291, %v1545
      %v1601 = vadd.f32 %v292, %v1547
      %v1602 = vadd.f32 %v293, %v1550
      %v1603 = vadd.f32 %v294, %v1552
      %v1604 = vadd.f32 %v295, %v1555
      %v1605 = vadd.f32 %v296, %v1557
      %v1606 = vadd.f32 %v297, %v1560
      %v1607 = vadd.f32 %v298, %v1562
      %v1608 = vadd.f32 %v299, %v1565
      %v1609 = vadd.f32 %v300, %v1567
      %v1610 = vadd.f32 %v301, %v1570
      %v1611 = vadd.f32 %v302, %v1572
      %v1612 = vadd.f32 %v303, %v1575
      %v1613 = vadd.f32 %v304, %v1577
      %v1614 = vadd.f32 %v305, %v1580
      %v1615 = vadd.f32 %v306, %v1582
      %vm1616 = vcmask 523264
      %1617 = vst.msk [vmem:[#allocation2] sm:$0xff] %vm1616, %v1584
      %1618 = vst.msk [vmem:[#allocation2 + $0x8] sm:$0xff] %vm1616, %v1585
      %1619 = vst.msk [vmem:[#allocation2 + $0x10] sm:$0xff] %vm1616, %v1586
      %1620 = vst.msk [vmem:[#allocation2 + $0x18] sm:$0xff] %vm1616, %v1587
      %1621 = vst.msk [vmem:[#allocation2 + $0x20] sm:$0xff] %vm1616, %v1588
      %1622 = vst.msk [vmem:[#allocation2 + $0x28] sm:$0xff] %vm1616, %v1589
      %1623 = vst.msk [vmem:[#allocation2 + $0x30] sm:$0xff] %vm1616, %v1590
      %1624 = vst.msk [vmem:[#allocation2 + $0x38] sm:$0xff] %vm1616, %v1591
      %1625 = vst.msk [vmem:[#allocation2 + $0x40] sm:$0xff] %vm1616, %v1592
      %1626 = vst.msk [vmem:[#allocation2 + $0x48] sm:$0xff] %vm1616, %v1593
      %1627 = vst.msk [vmem:[#allocation2 + $0x50] sm:$0xff] %vm1616, %v1594
      %1628 = vst.msk [vmem:[#allocation2 + $0x58] sm:$0xff] %vm1616, %v1595
      %1629 = vst.msk [vmem:[#allocation2 + $0x60] sm:$0xff] %vm1616, %v1596
      %1630 = vst.msk [vmem:[#allocation2 + $0x68] sm:$0xff] %vm1616, %v1597
      %1631 = vst.msk [vmem:[#allocation2 + $0x70] sm:$0xff] %vm1616, %v1598
      %1632 = vst.msk [vmem:[#allocation2 + $0x78] sm:$0xff] %vm1616, %v1599
      %1633 = vst.msk [vmem:[#allocation2 + $0x80] sm:$0xff] %vm1616, %v1600
      %1634 = vst.msk [vmem:[#allocation2 + $0x88] sm:$0xff] %vm1616, %v1601
      %1635 = vst.msk [vmem:[#allocation2 + $0x90] sm:$0xff] %vm1616, %v1602
      %1636 = vst.msk [vmem:[#allocation2 + $0x98] sm:$0xff] %vm1616, %v1603
      %1637 = vst.msk [vmem:[#allocation2 + $0xa0] sm:$0xff] %vm1616, %v1604
      %1638 = vst.msk [vmem:[#allocation2 + $0xa8] sm:$0xff] %vm1616, %v1605
      %1639 = vst.msk [vmem:[#allocation2 + $0xb0] sm:$0xff] %vm1616, %v1606
      %1640 = vst.msk [vmem:[#allocation2 + $0xb8] sm:$0xff] %vm1616, %v1607
      %1641 = vst.msk [vmem:[#allocation2 + $0xc0] sm:$0xff] %vm1616, %v1608
      %1642 = vst.msk [vmem:[#allocation2 + $0xc8] sm:$0xff] %vm1616, %v1609
      %1643 = vst.msk [vmem:[#allocation2 + $0xd0] sm:$0xff] %vm1616, %v1610
      %1644 = vst.msk [vmem:[#allocation2 + $0xd8] sm:$0xff] %vm1616, %v1611
      %1645 = vst.msk [vmem:[#allocation2 + $0xe0] sm:$0xff] %vm1616, %v1612
      %1646 = vst.msk [vmem:[#allocation2 + $0xe8] sm:$0xff] %vm1616, %v1613
      %1647 = vst.msk [vmem:[#allocation2 + $0xf0] sm:$0xff] %vm1616, %v1614
      %1648 = vst.msk [vmem:[#allocation2 + $0xf8] sm:$0xff] %vm1616, %v1615
      // Predicated region
      $region33: #{basic_block_forward.4} parent=27 // pred_check
        %p1649 = pneg %p238
      $region34: #{basic_block_forward.4} parent=27 // pred_check_branch
        %1651 = sbr.rel (%p1649) target = $region36
      $region35: #{basic_block_forward.4} parent=27 // pred_region
        %v1652 = vld [vmem:[#allocation2] sm:$0xff]
        %v1653 = vld [vmem:[#allocation2 + $0x8] sm:$0xff]
        %v1654 = vld [vmem:[#allocation2 + $0x10] sm:$0xff]
        %v1655 = vld [vmem:[#allocation2 + $0x18] sm:$0xff]
        %v1656 = vld [vmem:[#allocation2 + $0x20] sm:$0xff]
        %v1657 = vld [vmem:[#allocation2 + $0x28] sm:$0xff]
        %v1658 = vld [vmem:[#allocation2 + $0x30] sm:$0xff]
        %v1659 = vld [vmem:[#allocation2 + $0x38] sm:$0xff]
        %v1660 = vld [vmem:[#allocation2 + $0x40] sm:$0xff]
        %v1661 = vld [vmem:[#allocation2 + $0x48] sm:$0xff]
        %v1662 = vld [vmem:[#allocation2 + $0x50] sm:$0xff]
        %v1663 = vld [vmem:[#allocation2 + $0x58] sm:$0xff]
        %v1664 = vld [vmem:[#allocation2 + $0x60] sm:$0xff]
        %v1665 = vld [vmem:[#allocation2 + $0x68] sm:$0xff]
        %v1666 = vld [vmem:[#allocation2 + $0x70] sm:$0xff]
        %v1667 = vld [vmem:[#allocation2 + $0x78] sm:$0xff]
        %v1668 = vld [vmem:[#allocation2 + $0x80] sm:$0xff]
        %v1669 = vld [vmem:[#allocation2 + $0x88] sm:$0xff]
        %v1670 = vld [vmem:[#allocation2 + $0x90] sm:$0xff]
        %v1671 = vld [vmem:[#allocation2 + $0x98] sm:$0xff]
        %v1672 = vld [vmem:[#allocation2 + $0xa0] sm:$0xff]
        %v1673 = vld [vmem:[#allocation2 + $0xa8] sm:$0xff]
        %v1674 = vld [vmem:[#allocation2 + $0xb0] sm:$0xff]
        %v1675 = vld [vmem:[#allocation2 + $0xb8] sm:$0xff]
        %v1676 = vld [vmem:[#allocation2 + $0xc0] sm:$0xff]
        %v1677 = vld [vmem:[#allocation2 + $0xc8] sm:$0xff]
        %v1678 = vld [vmem:[#allocation2 + $0xd0] sm:$0xff]
        %v1679 = vld [vmem:[#allocation2 + $0xd8] sm:$0xff]
        %v1680 = vld [vmem:[#allocation2 + $0xe0] sm:$0xff]
        %v1681 = vld [vmem:[#allocation2 + $0xe8] sm:$0xff]
        %v1682 = vld [vmem:[#allocation2 + $0xf0] sm:$0xff]
        %v1683 = vld [vmem:[#allocation2 + $0xf8] sm:$0xff]
        %v1684 = vpack.c.bf16 %v1652, %v1652
        %v1685 = vpack.c.bf16 %v1653, %v1653
        %v1686 = vpack.c.bf16 %v1654, %v1654
        %v1687 = vpack.c.bf16 %v1655, %v1655
        %v1688 = vpack.c.bf16 %v1656, %v1656
        %v1689 = vpack.c.bf16 %v1657, %v1657
        %v1690 = vpack.c.bf16 %v1658, %v1658
        %v1691 = vpack.c.bf16 %v1659, %v1659
        %v1692 = vpack.c.bf16 %v1660, %v1660
        %v1693 = vpack.c.bf16 %v1661, %v1661
        %v1694 = vpack.c.bf16 %v1662, %v1662
        %v1695 = vpack.c.bf16 %v1663, %v1663
        %v1696 = vpack.c.bf16 %v1664, %v1664
        %v1697 = vpack.c.bf16 %v1665, %v1665
        %v1698 = vpack.c.bf16 %v1666, %v1666
        %v1699 = vpack.c.bf16 %v1667, %v1667
        %v1700 = vpack.c.bf16 %v1668, %v1668
        %v1701 = vpack.c.bf16 %v1669, %v1669
        %v1702 = vpack.c.bf16 %v1670, %v1670
        %v1703 = vpack.c.bf16 %v1671, %v1671
        %v1704 = vpack.c.bf16 %v1672, %v1672
        %v1705 = vpack.c.bf16 %v1673, %v1673
        %v1706 = vpack.c.bf16 %v1674, %v1674
        %v1707 = vpack.c.bf16 %v1675, %v1675
        %v1708 = vpack.c.bf16 %v1676, %v1676
        %v1709 = vpack.c.bf16 %v1677, %v1677
        %v1710 = vpack.c.bf16 %v1678, %v1678
        %v1711 = vpack.c.bf16 %v1679, %v1679
        %v1712 = vpack.c.bf16 %v1680, %v1680
        %v1713 = vpack.c.bf16 %v1681, %v1681
        %v1714 = vpack.c.bf16 %v1682, %v1682
        %v1715 = vpack.c.bf16 %v1683, %v1683
        %vm1716 = vcmask 519168
        %1717 = vst.msk [vmem:[%s232] sm:$0xf] %vm1716, %v1684
        %1718 = vst.msk [vmem:[%s232 + $0x4] sm:$0xf] %vm1716, %v1685
        %1719 = vst.msk [vmem:[%s232 + $0x8] sm:$0xf] %vm1716, %v1686
        %1720 = vst.msk [vmem:[%s232 + $0xc] sm:$0xf] %vm1716, %v1687
        %1721 = vst.msk [vmem:[%s232 + $0x10] sm:$0xf] %vm1716, %v1688
        %1722 = vst.msk [vmem:[%s232 + $0x14] sm:$0xf] %vm1716, %v1689
        %1723 = vst.msk [vmem:[%s232 + $0x18] sm:$0xf] %vm1716, %v1690
        %1724 = vst.msk [vmem:[%s232 + $0x1c] sm:$0xf] %vm1716, %v1691
        %1725 = vst.msk [vmem:[%s232 + $0x20] sm:$0xf] %vm1716, %v1692
        %1726 = vst.msk [vmem:[%s232 + $0x24] sm:$0xf] %vm1716, %v1693
        %1727 = vst.msk [vmem:[%s232 + $0x28] sm:$0xf] %vm1716, %v1694
        %1728 = vst.msk [vmem:[%s232 + $0x2c] sm:$0xf] %vm1716, %v1695
        %1729 = vst.msk [vmem:[%s232 + $0x30] sm:$0xf] %vm1716, %v1696
        %1730 = vst.msk [vmem:[%s232 + $0x34] sm:$0xf] %vm1716, %v1697
        %1731 = vst.msk [vmem:[%s232 + $0x38] sm:$0xf] %vm1716, %v1698
        %1732 = vst.msk [vmem:[%s232 + $0x3c] sm:$0xf] %vm1716, %v1699
        %1733 = vst.msk [vmem:[%s232 + $0x40] sm:$0xf] %vm1716, %v1700
        %1734 = vst.msk [vmem:[%s232 + $0x44] sm:$0xf] %vm1716, %v1701
        %1735 = vst.msk [vmem:[%s232 + $0x48] sm:$0xf] %vm1716, %v1702
        %1736 = vst.msk [vmem:[%s232 + $0x4c] sm:$0xf] %vm1716, %v1703
        %1737 = vst.msk [vmem:[%s232 + $0x50] sm:$0xf] %vm1716, %v1704
        %1738 = vst.msk [vmem:[%s232 + $0x54] sm:$0xf] %vm1716, %v1705
        %1739 = vst.msk [vmem:[%s232 + $0x58] sm:$0xf] %vm1716, %v1706
        %1740 = vst.msk [vmem:[%s232 + $0x5c] sm:$0xf] %vm1716, %v1707
        %1741 = vst.msk [vmem:[%s232 + $0x60] sm:$0xf] %vm1716, %v1708
        %1742 = vst.msk [vmem:[%s232 + $0x64] sm:$0xf] %vm1716, %v1709
        %1743 = vst.msk [vmem:[%s232 + $0x68] sm:$0xf] %vm1716, %v1710
        %1744 = vst.msk [vmem:[%s232 + $0x6c] sm:$0xf] %vm1716, %v1711
        %1745 = vst.msk [vmem:[%s232 + $0x70] sm:$0xf] %vm1716, %v1712
        %1746 = vst.msk [vmem:[%s232 + $0x74] sm:$0xf] %vm1716, %v1713
        %1747 = vst.msk [vmem:[%s232 + $0x78] sm:$0xf] %vm1716, %v1714
        %1748 = vst.msk [vmem:[%s232 + $0x7c] sm:$0xf] %vm1716, %v1715
        %v1749 = vsel %vm1616, %v1652, 0.0
        %v1750 = vsel %vm1616, %v1653, 0.0
        %v1751 = vadd.f32 %v1749, %v1750
        %v1752 = vsel %vm1616, %v1654, 0.0
        %v1753 = vadd.f32 %v1751, %v1752
        %v1754 = vsel %vm1616, %v1655, 0.0
        %v1755 = vadd.f32 %v1753, %v1754
        %v1756 = vsel %vm1616, %v1656, 0.0
        %v1757 = vadd.f32 %v1755, %v1756
        %v1758 = vsel %vm1616, %v1657, 0.0
        %v1759 = vadd.f32 %v1757, %v1758
        %v1760 = vsel %vm1616, %v1658, 0.0
        %v1761 = vadd.f32 %v1759, %v1760
        %v1762 = vsel %vm1616, %v1659, 0.0
        %v1763 = vadd.f32 %v1761, %v1762
        %v1764 = vsel %vm1616, %v1660, 0.0
        %v1765 = vadd.f32 %v1763, %v1764
        %v1766 = vsel %vm1616, %v1661, 0.0
        %v1767 = vadd.f32 %v1765, %v1766
        %v1768 = vsel %vm1616, %v1662, 0.0
        %v1769 = vadd.f32 %v1767, %v1768
        %v1770 = vsel %vm1616, %v1663, 0.0
        %v1771 = vadd.f32 %v1769, %v1770
        %v1772 = vsel %vm1616, %v1664, 0.0
        %v1773 = vadd.f32 %v1771, %v1772
        %v1774 = vsel %vm1616, %v1665, 0.0
        %v1775 = vadd.f32 %v1773, %v1774
        %v1776 = vsel %vm1616, %v1666, 0.0
        %v1777 = vadd.f32 %v1775, %v1776
        %v1778 = vsel %vm1616, %v1667, 0.0
        %v1779 = vadd.f32 %v1777, %v1778
        %v1780 = vsel %vm1616, %v1668, 0.0
        %v1781 = vadd.f32 %v1779, %v1780
        %v1782 = vsel %vm1616, %v1669, 0.0
        %v1783 = vadd.f32 %v1781, %v1782
        %v1784 = vsel %vm1616, %v1670, 0.0
        %v1785 = vadd.f32 %v1783, %v1784
        %v1786 = vsel %vm1616, %v1671, 0.0
        %v1787 = vadd.f32 %v1785, %v1786
        %v1788 = vsel %vm1616, %v1672, 0.0
        %v1789 = vadd.f32 %v1787, %v1788
        %v1790 = vsel %vm1616, %v1673, 0.0
        %v1791 = vadd.f32 %v1789, %v1790
        %v1792 = vsel %vm1616, %v1674, 0.0
        %v1793 = vadd.f32 %v1791, %v1792
        %v1794 = vsel %vm1616, %v1675, 0.0
        %v1795 = vadd.f32 %v1793, %v1794
        %v1796 = vsel %vm1616, %v1676, 0.0
        %v1797 = vadd.f32 %v1795, %v1796
        %v1798 = vsel %vm1616, %v1677, 0.0
        %v1799 = vadd.f32 %v1797, %v1798
        %v1800 = vsel %vm1616, %v1678, 0.0
        %v1801 = vadd.f32 %v1799, %v1800
        %v1802 = vsel %vm1616, %v1679, 0.0
        %v1803 = vadd.f32 %v1801, %v1802
        %v1804 = vsel %vm1616, %v1680, 0.0
        %v1805 = vadd.f32 %v1803, %v1804
        %v1806 = vsel %vm1616, %v1681, 0.0
        %v1807 = vadd.f32 %v1805, %v1806
        %v1808 = vsel %vm1616, %v1682, 0.0
        %v1809 = vadd.f32 %v1807, %v1808
        %v1810 = vsel %vm1616, %v1683, 0.0
        %v1811 = vadd.f32 %v1809, %v1810
        %v1812 = vrot.slane %v1811, 4
        %v1813 = vadd.f32 %v1811, %v1812
        %v1814 = vrot.slane %v1813, 2
        %v1815 = vadd.f32 %v1813, %v1814
        %v1816 = vrot.slane %v1815, 1
        %v1817 = vadd.f32 %v1815, %v1816
        %v1818 = vmul.f32 %v1652, %v1652
        %v1819 = vmul.f32 %v1653, %v1653
        %v1820 = vmul.f32 %v1654, %v1654
        %v1821 = vmul.f32 %v1655, %v1655
        %v1822 = vmul.f32 %v1656, %v1656
        %v1823 = vmul.f32 %v1657, %v1657
        %v1824 = vmul.f32 %v1658, %v1658
        %v1825 = vmul.f32 %v1659, %v1659
        %v1826 = vmul.f32 %v1660, %v1660
        %v1827 = vmul.f32 %v1661, %v1661
        %v1828 = vmul.f32 %v1662, %v1662
        %v1829 = vmul.f32 %v1663, %v1663
        %v1830 = vmul.f32 %v1664, %v1664
        %v1831 = vmul.f32 %v1665, %v1665
        %v1832 = vmul.f32 %v1666, %v1666
        %v1833 = vmul.f32 %v1667, %v1667
        %v1834 = vmul.f32 %v1668, %v1668
        %v1835 = vmul.f32 %v1669, %v1669
        %v1836 = vmul.f32 %v1670, %v1670
        %v1837 = vmul.f32 %v1671, %v1671
        %v1838 = vmul.f32 %v1672, %v1672
        %v1839 = vmul.f32 %v1673, %v1673
        %v1840 = vmul.f32 %v1674, %v1674
        %v1841 = vmul.f32 %v1675, %v1675
        %v1842 = vmul.f32 %v1676, %v1676
        %v1843 = vmul.f32 %v1677, %v1677
        %v1844 = vmul.f32 %v1678, %v1678
        %v1845 = vmul.f32 %v1679, %v1679
        %v1846 = vmul.f32 %v1680, %v1680
        %v1847 = vmul.f32 %v1681, %v1681
        %v1848 = vmul.f32 %v1682, %v1682
        %v1849 = vmul.f32 %v1683, %v1683
        %v1850 = vsel %vm1616, %v1818, 0.0
        %v1851 = vsel %vm1616, %v1819, 0.0
        %v1852 = vadd.f32 %v1850, %v1851
        %v1853 = vsel %vm1616, %v1820, 0.0
        %v1854 = vadd.f32 %v1852, %v1853
        %v1855 = vsel %vm1616, %v1821, 0.0
        %v1856 = vadd.f32 %v1854, %v1855
        %v1857 = vsel %vm1616, %v1822, 0.0
        %v1858 = vadd.f32 %v1856, %v1857
        %v1859 = vsel %vm1616, %v1823, 0.0
        %v1860 = vadd.f32 %v1858, %v1859
        %v1861 = vsel %vm1616, %v1824, 0.0
        %v1862 = vadd.f32 %v1860, %v1861
        %v1863 = vsel %vm1616, %v1825, 0.0
        %v1864 = vadd.f32 %v1862, %v1863
        %v1865 = vsel %vm1616, %v1826, 0.0
        %v1866 = vadd.f32 %v1864, %v1865
        %v1867 = vsel %vm1616, %v1827, 0.0
        %v1868 = vadd.f32 %v1866, %v1867
        %v1869 = vsel %vm1616, %v1828, 0.0
        %v1870 = vadd.f32 %v1868, %v1869
        %v1871 = vsel %vm1616, %v1829, 0.0
        %v1872 = vadd.f32 %v1870, %v1871
        %v1873 = vsel %vm1616, %v1830, 0.0
        %v1874 = vadd.f32 %v1872, %v1873
        %v1875 = vsel %vm1616, %v1831, 0.0
        %v1876 = vadd.f32 %v1874, %v1875
        %v1877 = vsel %vm1616, %v1832, 0.0
        %v1878 = vadd.f32 %v1876, %v1877
        %v1879 = vsel %vm1616, %v1833, 0.0
        %v1880 = vadd.f32 %v1878, %v1879
        %v1881 = vsel %vm1616, %v1834, 0.0
        %v1882 = vadd.f32 %v1880, %v1881
        %v1883 = vsel %vm1616, %v1835, 0.0
        %v1884 = vadd.f32 %v1882, %v1883
        %v1885 = vsel %vm1616, %v1836, 0.0
        %v1886 = vadd.f32 %v1884, %v1885
        %v1887 = vsel %vm1616, %v1837, 0.0
        %v1888 = vadd.f32 %v1886, %v1887
        %v1889 = vsel %vm1616, %v1838, 0.0
        %v1890 = vadd.f32 %v1888, %v1889
        %v1891 = vsel %vm1616, %v1839, 0.0
        %v1892 = vadd.f32 %v1890, %v1891
        %v1893 = vsel %vm1616, %v1840, 0.0
        %v1894 = vadd.f32 %v1892, %v1893
        %v1895 = vsel %vm1616, %v1841, 0.0
        %v1896 = vadd.f32 %v1894, %v1895
        %v1897 = vsel %vm1616, %v1842, 0.0
        %v1898 = vadd.f32 %v1896, %v1897
        %v1899 = vsel %vm1616, %v1843, 0.0
        %v1900 = vadd.f32 %v1898, %v1899
        %v1901 = vsel %vm1616, %v1844, 0.0
        %v1902 = vadd.f32 %v1900, %v1901
        %v1903 = vsel %vm1616, %v1845, 0.0
        %v1904 = vadd.f32 %v1902, %v1903
        %v1905 = vsel %vm1616, %v1846, 0.0
        %v1906 = vadd.f32 %v1904, %v1905
        %v1907 = vsel %vm1616, %v1847, 0.0
        %v1908 = vadd.f32 %v1906, %v1907
        %v1909 = vsel %vm1616, %v1848, 0.0
        %v1910 = vadd.f32 %v1908, %v1909
        %v1911 = vsel %vm1616, %v1849, 0.0
        %v1912 = vadd.f32 %v1910, %v1911
        %v1913 = vrot.slane %v1912, 4
        %v1914 = vadd.f32 %v1912, %v1913
        %v1915 = vrot.slane %v1914, 2
        %v1916 = vadd.f32 %v1914, %v1915
        %v1917 = vrot.slane %v1916, 1
        %v1918 = vadd.f32 %v1916, %v1917
        %v1919 = vlaneseq
        %v1920 = vshrl.u32 %v1919, 7
        %vm1921 = vcmp.eq.s32.totalorder %v1920, 0
        %v1922 = vsel %vm1921, %v1817, 0.0
        %vm1923 = vcmp.eq.s32.totalorder %v1920, 1
        %v1924 = vsel %vm1923, %v1918, 0.0
        %v1925 = vadd.f32 %v1922, %v1924
        %1926 = vst.msk [vmem:[%s237] sm:$0xff] %vm1616, %v1925
      $region36: #{basic_block_forward.4} parent=27 // pred_fallthru
        _
      %s1927 = smul.u32 32, %s19
      %p1928 = scmp.lt.s32.totalorder %s1927, 63
      %s1929 = scalar_select %p1928, %s1927, 63
      %s1930 = smul.addr %s1929, 4
      %s1931 = scalar_lea.vmem %s2, %s1930
      %p1932 = scmp.lt.s32.totalorder %s19, 1
      %s1933 = scalar_select %p1932, %s19, 1
      %s1934 = smul.addr %s1933, 8
      %s1935 = scalar_lea.vmem %s3, %s1934
      // Predicated region
      $region37: #{basic_block_forward.4} parent=27 // pred_check
        %p1936 = pneg %p99
      $region38: #{basic_block_forward.4} parent=27 // pred_check_branch
        %1938 = sbr.rel (%p1936) target = $region40
      $region39: #{basic_block_forward.4} parent=27 // pred_region
        %s1939 = smul.u32 32, %s19
      $region40: #{basic_block_forward.4} parent=27 // pred_fallthru
        _
      // Predicated region
      $region41: #{basic_block_forward.4} parent=27 // pred_check
        %p1940 = pneg %p125
      $region42: #{basic_block_forward.4} parent=27 // pred_check_branch
        %1942 = sbr.rel (%p1940) target = $region44
      $region43: #{basic_block_forward.4} parent=27 // pred_region
        _
      $region44: #{basic_block_forward.4} parent=27 // pred_fallthru
        _
    $region28: #{basic_block_forward.4} parent=5 // pred_fallthru
      _
    %p1943 = scmp.le.s32.totalorder 2, %s10
    // Predicated region
    $region45: #{basic_block_forward.4} parent=5 // pred_check
      %p1944 = pneg %p1943
    $region46: #{basic_block_forward.4} parent=5 // pred_check_branch
      %1946 = sbr.rel (%p1944) target = $region48
    $region47: #{basic_block_forward.4} parent=5 // pred_region
      %s1947 = ssub.s32 %s10, 2
      // Predicated region
      $region49: #{basic_block_forward.4} parent=47 // pred_check
        %p1948 = pneg %p105
      $region50: #{basic_block_forward.4} parent=47 // pred_check_branch
        %1950 = sbr.rel (%p1948) target = $region52
      $region51: #{basic_block_forward.4} parent=47 // pred_region
        %s1951 = smul.u32 32, %s21
        %p1952 = scmp.lt.s32.totalorder %s1951, 63
        %s1953 = scalar_select %p1952, %s1951, 63
        %s1954 = smul.addr %s1953, 4
        %s1955 = scalar_lea.vmem %s2, %s1954
      $region52: #{basic_block_forward.4} parent=47 // pred_fallthru
        _
      // Predicated region
      $region53: #{basic_block_forward.4} parent=47 // pred_check
        %p1956 = pneg %p131
      $region54: #{basic_block_forward.4} parent=47 // pred_check_branch
        %1958 = sbr.rel (%p1956) target = $region56
      $region55: #{basic_block_forward.4} parent=47 // pred_region
        %p1959 = scmp.lt.s32.totalorder %s21, 1
        %s1960 = scalar_select %p1959, %s21, 1
        %s1961 = smul.addr %s1960, 8
        %s1962 = scalar_lea.vmem %s3, %s1961
      $region56: #{basic_block_forward.4} parent=47 // pred_fallthru
        _
    $region48: #{basic_block_forward.4} parent=5 // pred_fallthru
      _
  $region6: #{basic_block_forward.4} parent=0 // loop_footer
    %s14 = sadd.s32 1, %s10
  $region7: #{basic_block_forward.4} parent=0 // loop_footer_branch
    %9 = sbr.rel target = $region3
  $region8: #{basic_block_forward.4} parent=0 // loop_exit
    _

// kernel: tile.22
$region0: #{tile.22}
  #allocation0 [shape = 's32[1]{0}', space=sflag, size = 0x4, scoped, tag = 'scoped memory for tile.22']
  %s0 = inlined_call_operand.<no memory space> [shape: f32[], index: 0, kind: input, shape index: {}]
  %s1 = inlined_call_operand.vmem [shape: f32[1,128], index: 1, kind: output, shape index: {}]
  %v2 = vstv %s0
  %3 = vst [vmem:[%s1] sm:$0x1] %v2

// kernel: basic_block_forward.7
$region0: #{basic_block_forward.7}
  #allocation0 [shape = 'u32[]', space=smem, size = 0x4, offset = 0x4, fixed_abs, tag = 'smem constant byte address 0x4 - core index']
  #allocation1 [shape = 'u32[72,128]{1,0:T(1,128)}', space=vmem, size = 0x9000, scoped, tag = 'internal scratch']
  %s0 = inlined_call_operand.vmem [shape: bf16[256,128], index: 0, kind: input, shape index: {}]
  %s1 = inlined_call_operand.vmem [shape: f32[1,128], index: 1, kind: input, shape index: {}]
  %s2 = inlined_call_operand.vmem [shape: f32[1,128], index: 2, kind: input, shape index: {}]
  %s3 = inlined_call_operand.vmem [shape: f32[256,128], index: 3, kind: input, shape index: {}]
  %s4 = inlined_call_operand.vmem [shape: f32[1,128], index: 4, kind: input, shape index: {}]
  %s5 = inlined_call_operand.vmem [shape: f32[1,128], index: 5, kind: input, shape index: {}]
  %s6 = inlined_call_operand.vmem [shape: f32[256,128], index: 6, kind: output, shape index: {}]
  %s7 = sld [smem:[#allocation0]]
  $region57: #{basic_block_forward.7} parent=0
    _
  %s9 = ssub.s32 1, %s7
  %s10 = scalar_select 0, %s9, %s7
  loop: start=0, step=1, limit=4
  $region2: #{basic_block_forward.7} parent=0 // loop_pre_header
    _
  $region3: #{basic_block_forward.7} parent=0 // loop_header
    %s12 = sphi 0, %s16
    %p13 = scmp.ge.s32.totalorder %s12, 4
    %s22 = sphi 0, %s24
    %s25 = sphi 0, %s22
    %s26 = sphi 0, %s25
    %s42 = sphi 0, %s26
    %s46 = sphi 0, %s46
    %s48 = sphi 0, %s46
    %s49 = sphi 0, %s48
    %s63 = sphi 0, %s49
    %s67 = sphi 0, %s67
    %s69 = sphi 0, %s67
    %s70 = sphi 0, %s69
    %s84 = sphi 0, %s70
    %s90 = sphi 0, %s92
    %s93 = sphi 0, %s90
    %s94 = sphi 0, %s93
    %s110 = sphi 0, %s94
    %s114 = sphi 0, %s114
    %s116 = sphi 0, %s114
    %s117 = sphi 0, %s116
    %s131 = sphi 0, %s117
    %s135 = sphi 0, %s135
    %s137 = sphi 0, %s135
    %s138 = sphi 0, %s137
    %s152 = sphi 0, %s138
    %s158 = sphi 0, %s160
    %s161 = sphi 0, %s158
    %s162 = sphi 0, %s161
    %s178 = sphi 0, %s162
  $region4: #{basic_block_forward.7} parent=0 // loop_header_branch
    %15 = sbr.rel (%p13) target = $region8
  $region5: #{basic_block_forward.7} parent=0 // loop_body
    %s17 = ssub.s32 %s12, 1
    %s18 = ssub.s32 %s12, 2
    %s19 = sadd.s32 %s12, 1
    %s20 = ssub.s32 %s12, %s19
    %p21 = scmp.eq.s32.totalorder %s20, 0
    %s23 = sadd.s32 %s22, 1
    %s24 = scalar_select %p21, %s22, %s23
    %p27 = pneg %p21
    %p28 = scmp.eq.s32.totalorder %s12, 1
    %p29 = por %p27, %p28
    %p30 = scmp.ne.s32.totalorder %s22, %s25
    %p31 = scmp.eq.s32.totalorder %s12, 0
    %p32 = por %p30, %p31
    %p33 = scmp.ne.s32.totalorder %s22, %s25
    %p34 = scmp.eq.s32.totalorder %s17, 1
    %p35 = por %p33, %p34
    %p36 = scmp.ne.s32.totalorder %s25, %s26
    %p37 = scmp.eq.s32.totalorder %s17, 0
    %p38 = por %p36, %p37
    %p39 = scmp.ne.s32.totalorder %s25, %s26
    %p40 = scmp.eq.s32.totalorder %s18, 1
    %p41 = por %p39, %p40
    %p43 = scmp.ne.s32.totalorder %s26, %s42
    %p44 = scmp.eq.s32.totalorder %s18, 0
    %p45 = por %p43, %p44
    %s47 = sadd.s32 %s46, 1
    %p50 = scmp.eq.s32.totalorder %s12, 1
    %p51 = scmp.ne.s32.totalorder %s46, %s48
    %p52 = scmp.eq.s32.totalorder %s12, 0
    %p53 = por %p51, %p52
    %p54 = scmp.ne.s32.totalorder %s46, %s48
    %p55 = scmp.eq.s32.totalorder %s17, 1
    %p56 = por %p54, %p55
    %p57 = scmp.ne.s32.totalorder %s48, %s49
    %p58 = scmp.eq.s32.totalorder %s17, 0
    %p59 = por %p57, %p58
    %p60 = scmp.ne.s32.totalorder %s48, %s49
    %p61 = scmp.eq.s32.totalorder %s18, 1
    %p62 = por %p60, %p61
    %p64 = scmp.ne.s32.totalorder %s49, %s63
    %p65 = scmp.eq.s32.totalorder %s18, 0
    %p66 = por %p64, %p65
    %s68 = sadd.s32 %s67, 1
    %p71 = scmp.eq.s32.totalorder %s12, 1
    %p72 = scmp.ne.s32.totalorder %s67, %s69
    %p73 = scmp.eq.s32.totalorder %s12, 0
    %p74 = por %p72, %p73
    %p75 = scmp.ne.s32.totalorder %s67, %s69
    %p76 = scmp.eq.s32.totalorder %s17, 1
    %p77 = por %p75, %p76
    %p78 = scmp.ne.s32.totalorder %s69, %s70
    %p79 = scmp.eq.s32.totalorder %s17, 0
    %p80 = por %p78, %p79
    %p81 = scmp.ne.s32.totalorder %s69, %s70
    %p82 = scmp.eq.s32.totalorder %s18, 1
    %p83 = por %p81, %p82
    %p85 = scmp.ne.s32.totalorder %s70, %s84
    %p86 = scmp.eq.s32.totalorder %s18, 0
    %p87 = por %p85, %p86
    %s88 = ssub.s32 %s12, %s19
    %p89 = scmp.eq.s32.totalorder %s88, 0
    %s91 = sadd.s32 %s90, 1
    %s92 = scalar_select %p89, %s90, %s91
    %p95 = pneg %p89
    %p96 = scmp.eq.s32.totalorder %s12, 1
    %p97 = por %p95, %p96
    %p98 = scmp.ne.s32.totalorder %s90, %s93
    %p99 = scmp.eq.s32.totalorder %s12, 0
    %p100 = por %p98, %p99
    %p101 = scmp.ne.s32.totalorder %s90, %s93
    %p102 = scmp.eq.s32.totalorder %s17, 1
    %p103 = por %p101, %p102
    %p104 = scmp.ne.s32.totalorder %s93, %s94
    %p105 = scmp.eq.s32.totalorder %s17, 0
    %p106 = por %p104, %p105
    %p107 = scmp.ne.s32.totalorder %s93, %s94
    %p108 = scmp.eq.s32.totalorder %s18, 1
    %p109 = por %p107, %p108
    %p111 = scmp.ne.s32.totalorder %s94, %s110
    %p112 = scmp.eq.s32.totalorder %s18, 0
    %p113 = por %p111, %p112
    %s115 = sadd.s32 %s114, 1
    %p118 = scmp.eq.s32.totalorder %s12, 1
    %p119 = scmp.ne.s32.totalorder %s114, %s116
    %p120 = scmp.eq.s32.totalorder %s12, 0
    %p121 = por %p119, %p120
    %p122 = scmp.ne.s32.totalorder %s114, %s116
    %p123 = scmp.eq.s32.totalorder %s17, 1
    %p124 = por %p122, %p123
    %p125 = scmp.ne.s32.totalorder %s116, %s117
    %p126 = scmp.eq.s32.totalorder %s17, 0
    %p127 = por %p125, %p126
    %p128 = scmp.ne.s32.totalorder %s116, %s117
    %p129 = scmp.eq.s32.totalorder %s18, 1
    %p130 = por %p128, %p129
    %p132 = scmp.ne.s32.totalorder %s117, %s131
    %p133 = scmp.eq.s32.totalorder %s18, 0
    %p134 = por %p132, %p133
    %s136 = sadd.s32 %s135, 1
    %p139 = scmp.eq.s32.totalorder %s12, 1
    %p140 = scmp.ne.s32.totalorder %s135, %s137
    %p141 = scmp.eq.s32.totalorder %s12, 0
    %p142 = por %p140, %p141
    %p143 = scmp.ne.s32.totalorder %s135, %s137
    %p144 = scmp.eq.s32.totalorder %s17, 1
    %p145 = por %p143, %p144
    %p146 = scmp.ne.s32.totalorder %s137, %s138
    %p147 = scmp.eq.s32.totalorder %s17, 0
    %p148 = por %p146, %p147
    %p149 = scmp.ne.s32.totalorder %s137, %s138
    %p150 = scmp.eq.s32.totalorder %s18, 1
    %p151 = por %p149, %p150
    %p153 = scmp.ne.s32.totalorder %s138, %s152
    %p154 = scmp.eq.s32.totalorder %s18, 0
    %p155 = por %p153, %p154
    %s156 = ssub.s32 %s12, %s19
    %p157 = scmp.eq.s32.totalorder %s156, 0
    %s159 = sadd.s32 %s158, 1
    %s160 = scalar_select %p157, %s158, %s159
    %p163 = pneg %p157
    %p164 = scmp.eq.s32.totalorder %s12, 1
    %p165 = por %p163, %p164
    %p166 = scmp.ne.s32.totalorder %s158, %s161
    %p167 = scmp.eq.s32.totalorder %s12, 0
    %p168 = por %p166, %p167
    %p169 = scmp.ne.s32.totalorder %s158, %s161
    %p170 = scmp.eq.s32.totalorder %s17, 1
    %p171 = por %p169, %p170
    %p172 = scmp.ne.s32.totalorder %s161, %s162
    %p173 = scmp.eq.s32.totalorder %s17, 0
    %p174 = por %p172, %p173
    %p175 = scmp.ne.s32.totalorder %s161, %s162
    %p176 = scmp.eq.s32.totalorder %s18, 1
    %p177 = por %p175, %p176
    %p179 = scmp.ne.s32.totalorder %s162, %s178
    %p180 = scmp.eq.s32.totalorder %s18, 0
    %p181 = por %p179, %p180
    %p182 = scmp.le.s32.totalorder 1, %s12
    %p183 = scmp.lt.s32.totalorder %s12, 3
    %p184 = pnand %p182, %p183
    %p185 = pneg %p184
    // Predicated region
    $region9: #{basic_block_forward.7} parent=5 // pred_check
      _
    $region10: #{basic_block_forward.7} parent=5 // pred_check_branch
      %187 = sbr.rel (%p184) target = $region12
    $region11: #{basic_block_forward.7} parent=5 // pred_region
      %s188 = ssub.s32 %s12, 1
      // Predicated region
      $region13: #{basic_block_forward.7} parent=11 // pred_check
        %p189 = pneg %p59
      $region14: #{basic_block_forward.7} parent=11 // pred_check_branch
        %191 = sbr.rel (%p189) target = $region16
      $region15: #{basic_block_forward.7} parent=11 // pred_region
        _
      $region16: #{basic_block_forward.7} parent=11 // pred_fallthru
        _
      // Predicated region
      $region17: #{basic_block_forward.7} parent=11 // pred_check
        %p192 = pneg %p80
      $region18: #{basic_block_forward.7} parent=11 // pred_check_branch
        %194 = sbr.rel (%p192) target = $region20
      $region19: #{basic_block_forward.7} parent=11 // pred_region
        _
      $region20: #{basic_block_forward.7} parent=11 // pred_fallthru
        _
      // Predicated region
      $region21: #{basic_block_forward.7} parent=11 // pred_check
        %p195 = pneg %p127
      $region22: #{basic_block_forward.7} parent=11 // pred_check_branch
        %197 = sbr.rel (%p195) target = $region24
      $region23: #{basic_block_forward.7} parent=11 // pred_region
        _
      $region24: #{basic_block_forward.7} parent=11 // pred_fallthru
        _
      // Predicated region
      $region25: #{basic_block_forward.7} parent=11 // pred_check
        %p198 = pneg %p148
      $region26: #{basic_block_forward.7} parent=11 // pred_check_branch
        %200 = sbr.rel (%p198) target = $region28
      $region27: #{basic_block_forward.7} parent=11 // pred_region
        _
      $region28: #{basic_block_forward.7} parent=11 // pred_fallthru
        _
    $region12: #{basic_block_forward.7} parent=5 // pred_fallthru
      _
    %p201 = scmp.lt.s32.totalorder %s12, 2
    // Predicated region
    $region29: #{basic_block_forward.7} parent=5 // pred_check
      %p202 = pneg %p201
    $region30: #{basic_block_forward.7} parent=5 // pred_check_branch
      %204 = sbr.rel (%p202) target = $region32
    $region31: #{basic_block_forward.7} parent=5 // pred_region
      // Predicated region
      $region33: #{basic_block_forward.7} parent=31 // pred_check
        %p205 = pneg %p32
      $region34: #{basic_block_forward.7} parent=31 // pred_check_branch
        %207 = sbr.rel (%p205) target = $region36
      $region35: #{basic_block_forward.7} parent=31 // pred_region
        %s208 = smul.u32 16, %s12
        %p209 = scmp.lt.s32.totalorder %s208, 31
        %s210 = scalar_select %p209, %s208, 31
        %s211 = smul.addr %s210, 4
        %s212 = scalar_lea.vmem %s0, %s211
        %s213 = smul.u32 16, %s12
      $region36: #{basic_block_forward.7} parent=31 // pred_fallthru
        _
      // Predicated region
      $region37: #{basic_block_forward.7} parent=31 // pred_check
        %p214 = pneg %p100
      $region38: #{basic_block_forward.7} parent=31 // pred_check_branch
        %216 = sbr.rel (%p214) target = $region40
      $region39: #{basic_block_forward.7} parent=31 // pred_region
        %s217 = smul.u32 16, %s12
        %p218 = scmp.lt.s32.totalorder %s217, 31
        %s219 = scalar_select %p218, %s217, 31
        %s220 = smul.addr %s219, 8
        %s221 = scalar_lea.vmem %s3, %s220
        %s222 = smul.u32 16, %s12
      $region40: #{basic_block_forward.7} parent=31 // pred_fallthru
        _
    $region32: #{basic_block_forward.7} parent=5 // pred_fallthru
      _
    %p223 = scmp.le.s32.totalorder 1, %s12
    %p224 = scmp.lt.s32.totalorder %s12, 3
    %p225 = pnand %p223, %p224
    %p226 = pneg %p225
    // Predicated region
    $region41: #{basic_block_forward.7} parent=5 // pred_check
      _
    $region42: #{basic_block_forward.7} parent=5 // pred_check_branch
      %228 = sbr.rel (%p225) target = $region44
    $region43: #{basic_block_forward.7} parent=5 // pred_region
      %s229 = ssub.s32 %s12, 1
      %s230 = smul.u32 16, %s17
      %p231 = scmp.lt.s32.totalorder %s230, 31
      %s232 = scalar_select %p231, %s230, 31
      %s233 = smul.addr %s232, 4
      %s234 = scalar_lea.vmem %s0, %s233
      %p235 = pneg %p38
      %p236 = pneg %p35
      %p237 = pneg %p59
      %p238 = pneg %p56
      %p239 = pneg %p80
      %p240 = pneg %p77
      %s241 = smul.u32 16, %s17
      %p242 = scmp.lt.s32.totalorder %s241, 31
      %s243 = scalar_select %p242, %s241, 31
      %s244 = smul.addr %s243, 8
      %s245 = scalar_lea.vmem %s3, %s244
      %p246 = pneg %p106
      %p247 = pneg %p103
      %p248 = pneg %p127
      %p249 = pneg %p124
      %p250 = pneg %p148
      %p251 = pneg %p145
      %p252 = pneg %p174
      %p253 = pneg %p171
      %s254 = smul.u32 16, %s17
      %p255 = scmp.lt.s32.totalorder %s254, 31
      %s256 = scalar_select %p255, %s254, 31
      %s257 = smul.addr %s256, 8
      %s258 = scalar_lea.vmem %s6, %s257
      %s259 = smul.u32 16, %s17
      %p260 = scmp.lt.s32.totalorder %s259, 31
      %s261 = scalar_select %p260, %s259, 31
      %s262 = smul.addr %s261, 4
      %s263 = scalar_lea.vmem %s0, %s262
      %s264 = smul.u32 16, %s17
      %s265 = smul.u32 16, %s17
      %p266 = scmp.lt.s32.totalorder %s265, 31
      %s267 = scalar_select %p266, %s265, 31
      %s268 = smul.addr %s267, 8
      %s269 = scalar_lea.vmem %s3, %s268
      %s270 = smul.u32 16, %s17
      %s271 = smul.u32 16, %s17
      %p272 = scmp.lt.s32.totalorder %s271, 31
      %s273 = scalar_select %p272, %s271, 31
      %s274 = smul.addr %s273, 8
      %s275 = scalar_lea.vmem %s6, %s274
      %s276 = smul.u32 16, %s17
      %v277 = vld [vmem:[%s263] sm:$0xf]
      %v278 = vld [vmem:[%s263 + $0x4] sm:$0xf]
      %v279 = vld [vmem:[%s263 + $0x8] sm:$0xf]
      %v280 = vld [vmem:[%s263 + $0xc] sm:$0xf]
      %v281 = vld [vmem:[%s263 + $0x10] sm:$0xf]
      %v282 = vld [vmem:[%s263 + $0x14] sm:$0xf]
      %v283 = vld [vmem:[%s263 + $0x18] sm:$0xf]
      %v284 = vld [vmem:[%s263 + $0x1c] sm:$0xf]
      %v285 = vld [vmem:[%s263 + $0x20] sm:$0xf]
      %v286 = vld [vmem:[%s263 + $0x24] sm:$0xf]
      %v287 = vld [vmem:[%s263 + $0x28] sm:$0xf]
      %v288 = vld [vmem:[%s263 + $0x2c] sm:$0xf]
      %v289 = vld [vmem:[%s263 + $0x30] sm:$0xf]
      %v290 = vld [vmem:[%s263 + $0x34] sm:$0xf]
      %v291 = vld [vmem:[%s263 + $0x38] sm:$0xf]
      %v292 = vld [vmem:[%s263 + $0x3c] sm:$0xf]
      %v293 = vunpack.c.l.bf16 %v277
      %v294 = vunpack.c.l.bf16 %v278
      %v295 = vunpack.c.l.bf16 %v279
      %v296 = vunpack.c.l.bf16 %v280
      %v297 = vunpack.c.l.bf16 %v281
      %v298 = vunpack.c.l.bf16 %v282
      %v299 = vunpack.c.l.bf16 %v283
      %v300 = vunpack.c.l.bf16 %v284
      %v301 = vunpack.c.l.bf16 %v285
      %v302 = vunpack.c.l.bf16 %v286
      %v303 = vunpack.c.l.bf16 %v287
      %v304 = vunpack.c.l.bf16 %v288
      %v305 = vunpack.c.l.bf16 %v289
      %v306 = vunpack.c.l.bf16 %v290
      %v307 = vunpack.c.l.bf16 %v291
      %v308 = vunpack.c.l.bf16 %v292
      %v309 = vld [vmem:[%s1] sm:$0x1]
      %v311 = vperm.slane %v309, 0
      %v313 = vmul.f32 %v293, %v311
      %v314 = vmul.f32 %v294, %v311
      %v315 = vmul.f32 %v295, %v311
      %v316 = vmul.f32 %v296, %v311
      %v317 = vmul.f32 %v297, %v311
      %v318 = vmul.f32 %v298, %v311
      %v319 = vmul.f32 %v299, %v311
      %v320 = vmul.f32 %v300, %v311
      %v321 = vmul.f32 %v301, %v311
      %v322 = vmul.f32 %v302, %v311
      %v323 = vmul.f32 %v303, %v311
      %v324 = vmul.f32 %v304, %v311
      %v325 = vmul.f32 %v305, %v311
      %v326 = vmul.f32 %v306, %v311
      %v327 = vmul.f32 %v307, %v311
      %v328 = vmul.f32 %v308, %v311
      %v329 = vld [vmem:[%s2] sm:$0x1]
      %v331 = vperm.slane %v329, 0
      %v333 = vadd.f32 %v313, %v331
      %v334 = vadd.f32 %v314, %v331
      %v335 = vadd.f32 %v315, %v331
      %v336 = vadd.f32 %v316, %v331
      %v337 = vadd.f32 %v317, %v331
      %v338 = vadd.f32 %v318, %v331
      %v339 = vadd.f32 %v319, %v331
      %v340 = vadd.f32 %v320, %v331
      %v341 = vadd.f32 %v321, %v331
      %v342 = vadd.f32 %v322, %v331
      %v343 = vadd.f32 %v323, %v331
      %v344 = vadd.f32 %v324, %v331
      %v345 = vadd.f32 %v325, %v331
      %v346 = vadd.f32 %v326, %v331
      %v347 = vadd.f32 %v327, %v331
      %v348 = vadd.f32 %v328, %v331
      %v349 = vld [vmem:[%s269] sm:$0xff]
      %v350 = vld [vmem:[%s269 + $0x8] sm:$0xff]
      %v351 = vld [vmem:[%s269 + $0x10] sm:$0xff]
      %v352 = vld [vmem:[%s269 + $0x18] sm:$0xff]
      %v353 = vld [vmem:[%s269 + $0x20] sm:$0xff]
      %v354 = vld [vmem:[%s269 + $0x28] sm:$0xff]
      %v355 = vld [vmem:[%s269 + $0x30] sm:$0xff]
      %v356 = vld [vmem:[%s269 + $0x38] sm:$0xff]
      %v357 = vld [vmem:[%s269 + $0x40] sm:$0xff]
      %v358 = vld [vmem:[%s269 + $0x48] sm:$0xff]
      %v359 = vld [vmem:[%s269 + $0x50] sm:$0xff]
      %v360 = vld [vmem:[%s269 + $0x58] sm:$0xff]
      %v361 = vld [vmem:[%s269 + $0x60] sm:$0xff]
      %v362 = vld [vmem:[%s269 + $0x68] sm:$0xff]
      %v363 = vld [vmem:[%s269 + $0x70] sm:$0xff]
      %v364 = vld [vmem:[%s269 + $0x78] sm:$0xff]
      %v365 = vld [vmem:[%s4] sm:$0x1]
      %v367 = vperm.slane %v365, 0
      %v369 = vmul.f32 %v349, %v367
      %v370 = vmul.f32 %v350, %v367
      %v371 = vmul.f32 %v351, %v367
      %v372 = vmul.f32 %v352, %v367
      %v373 = vmul.f32 %v353, %v367
      %v374 = vmul.f32 %v354, %v367
      %v375 = vmul.f32 %v355, %v367
      %v376 = vmul.f32 %v356, %v367
      %v377 = vmul.f32 %v357, %v367
      %v378 = vmul.f32 %v358, %v367
      %v379 = vmul.f32 %v359, %v367
      %v380 = vmul.f32 %v360, %v367
      %v381 = vmul.f32 %v361, %v367
      %v382 = vmul.f32 %v362, %v367
      %v383 = vmul.f32 %v363, %v367
      %v384 = vmul.f32 %v364, %v367
      %v385 = vadd.f32 %v333, %v369
      %v386 = vadd.f32 %v334, %v370
      %v387 = vadd.f32 %v335, %v371
      %v388 = vadd.f32 %v336, %v372
      %v389 = vadd.f32 %v337, %v373
      %v390 = vadd.f32 %v338, %v374
      %v391 = vadd.f32 %v339, %v375
      %v392 = vadd.f32 %v340, %v376
      %v393 = vadd.f32 %v341, %v377
      %v394 = vadd.f32 %v342, %v378
      %v395 = vadd.f32 %v343, %v379
      %v396 = vadd.f32 %v344, %v380
      %v397 = vadd.f32 %v345, %v381
      %v398 = vadd.f32 %v346, %v382
      %v399 = vadd.f32 %v347, %v383
      %v400 = vadd.f32 %v348, %v384
      %v401 = vld [vmem:[%s5] sm:$0x1]
      %v403 = vperm.slane %v401, 0
      %v405 = vadd.f32 %v385, %v403
      %v406 = vadd.f32 %v386, %v403
      %v407 = vadd.f32 %v387, %v403
      %v408 = vadd.f32 %v388, %v403
      %v409 = vadd.f32 %v389, %v403
      %v410 = vadd.f32 %v390, %v403
      %v411 = vadd.f32 %v391, %v403
      %v412 = vadd.f32 %v392, %v403
      %v413 = vadd.f32 %v393, %v403
      %v414 = vadd.f32 %v394, %v403
      %v415 = vadd.f32 %v395, %v403
      %v416 = vadd.f32 %v396, %v403
      %v417 = vadd.f32 %v397, %v403
      %v418 = vadd.f32 %v398, %v403
      %v419 = vadd.f32 %v399, %v403
      %v420 = vadd.f32 %v400, %v403
      %v421 = vmax.f32 %v405, 0.0
      %v422 = vmax.f32 %v406, 0.0
      %v423 = vmax.f32 %v407, 0.0
      %v424 = vmax.f32 %v408, 0.0
      %v425 = vmax.f32 %v409, 0.0
      %v426 = vmax.f32 %v410, 0.0
      %v427 = vmax.f32 %v411, 0.0
      %v428 = vmax.f32 %v412, 0.0
      %v429 = vmax.f32 %v413, 0.0
      %v430 = vmax.f32 %v414, 0.0
      %v431 = vmax.f32 %v415, 0.0
      %v432 = vmax.f32 %v416, 0.0
      %v433 = vmax.f32 %v417, 0.0
      %v434 = vmax.f32 %v418, 0.0
      %v435 = vmax.f32 %v419, 0.0
      %v436 = vmax.f32 %v420, 0.0
      %437 = vst [vmem:[%s275] sm:$0xff] %v421
      %438 = vst [vmem:[%s275 + $0x8] sm:$0xff] %v422
      %439 = vst [vmem:[%s275 + $0x10] sm:$0xff] %v423
      %440 = vst [vmem:[%s275 + $0x18] sm:$0xff] %v424
      %441 = vst [vmem:[%s275 + $0x20] sm:$0xff] %v425
      %442 = vst [vmem:[%s275 + $0x28] sm:$0xff] %v426
      %443 = vst [vmem:[%s275 + $0x30] sm:$0xff] %v427
      %444 = vst [vmem:[%s275 + $0x38] sm:$0xff] %v428
      %445 = vst [vmem:[%s275 + $0x40] sm:$0xff] %v429
      %446 = vst [vmem:[%s275 + $0x48] sm:$0xff] %v430
      %447 = vst [vmem:[%s275 + $0x50] sm:$0xff] %v431
      %448 = vst [vmem:[%s275 + $0x58] sm:$0xff] %v432
      %449 = vst [vmem:[%s275 + $0x60] sm:$0xff] %v433
      %450 = vst [vmem:[%s275 + $0x68] sm:$0xff] %v434
      %451 = vst [vmem:[%s275 + $0x70] sm:$0xff] %v435
      %452 = vst [vmem:[%s275 + $0x78] sm:$0xff] %v436
      %s453 = smul.u32 16, %s17
      %p454 = scmp.lt.s32.totalorder %s453, 31
      %s455 = scalar_select %p454, %s453, 31
      %s456 = smul.addr %s455, 8
      %s457 = scalar_lea.vmem %s6, %s456
      // Predicated region
      $region45: #{basic_block_forward.7} parent=43 // pred_check
        %p458 = pneg %p171
      $region46: #{basic_block_forward.7} parent=43 // pred_check_branch
        %460 = sbr.rel (%p458) target = $region48
      $region47: #{basic_block_forward.7} parent=43 // pred_region
        %s461 = smul.u32 16, %s17
      $region48: #{basic_block_forward.7} parent=43 // pred_fallthru
        _
    $region44: #{basic_block_forward.7} parent=5 // pred_fallthru
      _
    %p462 = scmp.le.s32.totalorder 2, %s12
    // Predicated region
    $region49: #{basic_block_forward.7} parent=5 // pred_check
      %p463 = pneg %p462
    $region50: #{basic_block_forward.7} parent=5 // pred_check_branch
      %465 = sbr.rel (%p463) target = $region52
    $region51: #{basic_block_forward.7} parent=5 // pred_region
      %s466 = ssub.s32 %s12, 2
      // Predicated region
      $region53: #{basic_block_forward.7} parent=51 // pred_check
        %p467 = pneg %p177
      $region54: #{basic_block_forward.7} parent=51 // pred_check_branch
        %469 = sbr.rel (%p467) target = $region56
      $region55: #{basic_block_forward.7} parent=51 // pred_region
        %s470 = smul.u32 16, %s18
        %p471 = scmp.lt.s32.totalorder %s470, 31
        %s472 = scalar_select %p471, %s470, 31
        %s473 = smul.addr %s472, 8
        %s474 = scalar_lea.vmem %s6, %s473
      $region56: #{basic_block_forward.7} parent=51 // pred_fallthru
        _
    $region52: #{basic_block_forward.7} parent=5 // pred_fallthru
      _
  $region6: #{basic_block_forward.7} parent=0 // loop_footer
    %s16 = sadd.s32 1, %s12
  $region7: #{basic_block_forward.7} parent=0 // loop_footer_branch
    %11 = sbr.rel target = $region3
  $region8: #{basic_block_forward.7} parent=0 // loop_exit
    _

</llo_original>
